<compile_context>
chip_gen: v5e
topology: v5e:2x2
jax: 0.10.0
libtpu: 0.0.40
codegen_flags: <defaults>
</compile_context>

<pallas_src>
import functools

import jax
import jax.numpy as jnp
from jax import lax
from jax.experimental import pallas as pl
from jax.experimental.pallas import tpu as pltpu


# ----------------------------- kernel ---------------------------------------
def _message_kernel(sv_ref, cache_ref, src_ref, dst_ref, r_ref, dcol_ref, drow_ref,
                    wW_ref, bW_ref, out_ref, acc_ref, *, cutoff):
    Fp = sv_ref.shape[1] // 4        # padded feature width (multiple of 128)
    N = sv_ref.shape[0]              # padded node count (multiple of 8)
    R8 = wW_ref.shape[0]             # rbf count rounded up to 8
    c = pl.program_id(0)             # core (v7x TensorCore) index
    k = pl.program_id(1)             # edge-tile index within this core
    is_last = k == pl.num_programs(1) - 1

    # ---- zero the fused [delta_s | delta_v] accumulator at each core's first tile
    @pl.when(k == 0)
    def _init():
        acc_ref[...] = jnp.zeros_like(acc_ref)

    # ---- per-edge-tile work -------------------------------------------------
    d = dcol_ref[...]                                    # [Et, 1]
    inv_d = pl.reciprocal(d, approx=True)                # EUP reciprocal, reused
    Et = d.shape[0]

    # RBF in transposed [R8, Et] layout (R on sublanes, edges on lanes): sin only
    # runs over round_up(R, 8) rows.  Padded wW rows are zero -> no contribution.
    n_sub = (lax.broadcasted_iota(jnp.int32, (R8, Et), 0) + 1).astype(jnp.float32)
    sin_T = jnp.sin(drow_ref[...] * (jnp.pi / cutoff) * n_sub)        # [R8, Et]
    # (sin * 1/d) @ wW == (sin @ wW) * 1/d  (1/d scales lhs rows), so fold 1/d in
    # after the matmul and before the bias.
    S = lax.dot_general(sin_T, wW_ref[...],
                        dimension_numbers=(((0,), (0,)), ((), ())),
                        preferred_element_type=jnp.float32)           # [Et, 2Fp]
    fc = jnp.where(d < cutoff, 0.5 * (jnp.cos((jnp.pi / cutoff) * d) + 1.0), 0.0)
    W = (S * inv_d + bW_ref[...]) * fc                                # [Et, 2Fp]

    # bf16 one-hots: gather one-hot [Et, N]; scatter one-hot pre-transposed [N, Et]
    col = lax.broadcasted_iota(jnp.int32, (Et, N), 1)
    oh_src = (src_ref[...] == col).astype(jnp.bfloat16)               # [Et, N]
    row = lax.broadcasted_iota(jnp.int32, (N, Et), 0)
    oh_dstT = (row == dst_ref[...]).astype(jnp.bfloat16)              # [N, Et]

    # single fused gather of [phi0 | phi2 | v0 | v1 | v2]  (bf16 x bf16 -> f32)
    g = jnp.dot(oh_src, cache_ref[...], preferred_element_type=jnp.float32)  # [Et, 5Fp]
    phi_e = g[:, 0:2 * Fp]
    v_e = g[:, 2 * Fp:5 * Fp]

    split = W * phi_e
    Wvv = split[:, 0:Fp]             # live chunk 0
    Wss = split[:, Fp:2 * Fp]        # live chunk 2 (the shadowed "Wvs" in PyTorch)

    unit = r_ref[...] * inv_d                                          # [Et, 3]
    v_sum = jnp.concatenate(
        [v_e[:, i * Fp:(i + 1) * Fp] * Wvv + Wss * unit[:, i:i + 1] for i in range(3)],
        axis=1)                                                        # [Et, 3Fp]

    # single fused scatter of [delta_s | delta_v] with f32 accumulation in VMEM
    msg = jnp.concatenate([Wss, v_sum], axis=1).astype(jnp.bfloat16)   # [Et, 4Fp]
    acc_ref[...] += jnp.dot(oh_dstT, msg, preferred_element_type=jnp.float32)

    # ---- finalize: core 0 adds the residual [s | v]; other cores emit a bare
    #      partial slab (summed in the wrapper).  One wide lane-dense writeback.
    @pl.when(jnp.logical_and(is_last, c == 0))
    def _finalize_core0():
        out_ref[...] = sv_ref[...] + acc_ref[...]

    @pl.when(jnp.logical_and(is_last, c > 0))
    def _finalize_partial():
        out_ref[...] = acc_ref[...]


# ----------------------------- helpers ---------------------------------------
def _round_up(x, m):
    return ((x + m - 1) // m) * m


def _pack_chunks(chunks, width, width_pad, rows_pad, dtype):
    """Concatenate [rows, width] chunks, each placed at the start of a width_pad-wide
    slot, then zero-pad rows to rows_pad."""
    cols = [jnp.pad(ch.astype(dtype), ((0, 0), (0, width_pad - width))) for ch in chunks]
    packed = jnp.concatenate(cols, axis=1)
    return jnp.pad(packed, ((0, rows_pad - packed.shape[0]), (0, 0)))


def _vmem_capacity_bytes():
    try:
        cap = getattr(pltpu.get_tpu_info(), "vmem_capacity_bytes", None)
        if cap:
            return int(cap)
    except Exception:
        pass
    return 64 * 1024 * 1024          # conservative default (v7x per-core VMEM)


# ----------------------------- wrapper ---------------------------------------
def message_layer(s, v, edge_indexes, r_ij, distance, params, cutoff_distance,
                  *, num_cores=1):
    """s:[N,F] f32, v:[N,3,F] f32, edge_indexes:[E,2] i32 (col0=dst, col1=src),
    r_ij:[E,3] f32, distance:[E] f32.  num_cores>1 (v7x) splits edge tiles across
    TensorCores via a leading 'parallel' grid axis with per-core partial slabs."""
    f32 = jnp.float32
    N, F = s.shape
    E = distance.shape[0]
    R = params["wW"].shape[0]
    cutoff = float(cutoff_distance)

    F_pad = _round_up(F, 128)
    N_pad = _round_up(N, 8)
    R8 = _round_up(R, 8)

    vmem_cap = _vmem_capacity_bytes()

    # --- edge tiling: E is the reduction grid axis --------------------------------
    if num_cores == 1 and E <= 256:
        e_tile = _round_up(max(E, 8), 8)       # single full tile (no 128 constraint)
        E_pad = e_tile
    else:
        max_tile = 512 if vmem_cap >= 96 * 1024 * 1024 else 256    # v5e/v6e vs v7x
        cand = [t for t in (128, 256, 512) if t <= max_tile]

        def epad(t):
            return _round_up(E, t * num_cores)

        best_pad = min(epad(t) for t in cand)
        # prefer the largest tile unless it inflates padded-edge work by >25%
        ok = [t for t in cand if epad(t) <= best_pad * 1.25]
        e_tile = max(ok)
        E_pad = epad(e_tile)
    n_tiles = E_pad // e_tile
    tiles_per_core = n_tiles // num_cores

    # --- phi MLP hoisted to XLA; only the live chunks (0 and 2) are kept ----------
    s32 = s.astype(f32)
    h = s32 @ params["w1"].astype(f32) + params["b1"].astype(f32)
    h = h * jax.nn.sigmoid(h)                                   # SiLU
    phi = h @ params["w2"].astype(f32) + params["b2"].astype(f32)
    phi0, phi2 = phi[:, :F], phi[:, 2 * F:3 * F]

    v32 = v.astype(f32)
    v_chunks = [v32[:, 0, :], v32[:, 1, :], v32[:, 2, :]]

    # residents
    sv_p = _pack_chunks([s32] + v_chunks, F, F_pad, N_pad, f32)                  # [N,4Fp] f32
    cache_p = _pack_chunks([phi0, phi2] + v_chunks, F, F_pad, N_pad, jnp.bfloat16)  # [N,5Fp]
    wW = params["wW"].astype(f32)
    wW_p = _pack_chunks([wW[:, :F], wW[:, 2 * F:3 * F]], F, F_pad, R8, f32)      # [R8,2Fp]
    bW = params["bW"].astype(f32).reshape(1, 3 * F)
    bW_p = _pack_chunks([bW[:, :F], bW[:, 2 * F:3 * F]], F, F_pad, 1, f32)       # [1,2Fp]

    # edge data; padded edges get d = 2*cutoff -> f_cut == 0 -> zero contribution
    pad_e = E_pad - E
    src_p = jnp.pad(edge_indexes[:, 1].astype(jnp.int32).reshape(E, 1), ((0, pad_e), (0, 0)))
    dst_p = jnp.pad(edge_indexes[:, 0].astype(jnp.int32).reshape(1, E), ((0, 0), (0, pad_e)))
    r_p = jnp.pad(r_ij.astype(f32), ((0, pad_e), (0, 0)))
    d32 = distance.astype(f32)
    dcol_p = jnp.pad(d32.reshape(E, 1), ((0, pad_e), (0, 0)), constant_values=2.0 * cutoff)
    drow_p = jnp.pad(d32.reshape(1, E), ((0, 0), (0, pad_e)), constant_values=2.0 * cutoff)

    kernel = functools.partial(_message_kernel, cutoff=cutoff)

    def _vmem_limit(single_buffer):
        in_buf = 1 if single_buffer else 2
        out_buf = 1 if (single_buffer and num_cores == 1) else 2
        resident = in_buf * (N_pad * 4 * F_pad * 4       # sv (f32)
                             + N_pad * 5 * F_pad * 2     # phi|v cache (bf16)
                             + R8 * 2 * F_pad * 4        # wW
                             + 2 * F_pad * 4)            # bW
        outputs = out_buf * N_pad * 4 * F_pad * 4
        acc = N_pad * 4 * F_pad * 4
        edges = 2 * e_tile * 28                          # src/dst/r/d tiles, double-buffered
        temps = (12 * e_tile * N_pad                     # one-hot iotas + bf16 one-hots
                 + 64 * e_tile * F_pad                   # [Et, kF] gather/W/split/msg slabs
                 + 8 * R8 * e_tile)                      # transposed sin / angles
        need = resident + outputs + acc + edges + temps + (8 << 20)   # headroom
        return max(16 << 20, min(need, int(vmem_cap * 0.85)))

    def _run(single_buffer):
        # grid-invariant operands: single-buffered (double-buffering buys nothing)
        res_kw = {"pipeline_mode": pl.Buffered(1)} if single_buffer else {}
        out_kw = dict(res_kw) if num_cores == 1 else {}   # out block index varies with core

        def edge_col(width):
            return pl.BlockSpec((e_tile, width), lambda c, k: (c * tiles_per_core + k, 0))

        def edge_row():
            return pl.BlockSpec((1, e_tile), lambda c, k: (0, c * tiles_per_core + k))

        grid_spec = pltpu.PrefetchScalarGridSpec(
            num_scalar_prefetch=0,
            grid=(num_cores, tiles_per_core),
            in_specs=[
                pl.BlockSpec((N_pad, 4 * F_pad), lambda c, k: (0, 0), **res_kw),  # sv (residual)
                pl.BlockSpec((N_pad, 5 * F_pad), lambda c, k: (0, 0), **res_kw),  # phi|v cache
                edge_col(1),        # src (edge col 1)
                edge_row(),         # dst (edge col 0), row layout
                edge_col(3),        # r_ij
                edge_col(1),        # distance, column layout
                edge_row(),         # distance, row layout (for transposed RBF)
                pl.BlockSpec((R8, 2 * F_pad), lambda c, k: (0, 0), **res_kw),     # wW (live)
                pl.BlockSpec((1, 2 * F_pad), lambda c, k: (0, 0), **res_kw),      # bW (live)
            ],
            out_specs=pl.BlockSpec((None, N_pad, 4 * F_pad),
                                   lambda c, k: (c, 0, 0), **out_kw),
            scratch_shapes=[pltpu.VMEM((N_pad, 4 * F_pad), f32)],  # fused delta_s|delta_v acc
        )
        return pl.pallas_call(
            kernel,
            out_shape=jax.ShapeDtypeStruct((num_cores, N_pad, 4 * F_pad), f32),
            grid_spec=grid_spec,
            compiler_params=pltpu.CompilerParams(
                dimension_semantics=("parallel", "arbitrary"),   # cores x edge-reduction
                vmem_limit_bytes=_vmem_limit(single_buffer),
            ),
        )(sv_p, cache_p, src_p, dst_p, r_p, dcol_p, drow_p, wW_p, bW_p)

    try:
        out = _run(single_buffer=True)
    except Exception:
        # fallback if this jax build rejects pl.Buffered(1); semantics are identical
        out = _run(single_buffer=False)

    sv_new = out[0] if num_cores == 1 else jnp.sum(out, axis=0)
    new_s = sv_new[:N, :F]
    new_v = sv_new[:, F_pad:4 * F_pad].reshape(N_pad, 3, F_pad)[:N, :, :F]
    return new_s, new_v


# -------------------- pure-JAX reference (for verification) ------------------
def message_layer_ref(s, v, edge_indexes, r_ij, distance, params, cutoff):
    F = s.shape[1]
    R = params["wW"].shape[0]
    n = jnp.arange(1, R + 1, dtype=jnp.float32)
    rbf = jnp.sin(distance[:, None] * n * jnp.pi / cutoff) / distance[:, None]
    W = rbf @ params["wW"] + params["bW"]
    fc = jnp.where(distance < cutoff, 0.5 * (jnp.cos(jnp.pi * distance / cutoff) + 1.0), 0.0)
    W = W * fc[:, None]
    h = s @ params["w1"] + params["b1"]
    h = h * jax.nn.sigmoid(h)
    phi = h @ params["w2"] + params["b2"]
    src = edge_indexes[:, 1]
    dst = edge_indexes[:, 0]
    split = W * phi[src]
    Wvv = split[:, :F]
    Wss = split[:, 2 * F:]          # reproduces the shadowed Wvs
    v_1 = v[src] * Wvv[:, None, :]
    v_2 = Wss[:, None, :] * (r_ij / distance[:, None])[:, :, None]
    v_sum = v_1 + v_2
    delta_s = jnp.zeros_like(s).at[dst].add(Wss)
    delta_v = jnp.zeros_like(v).at[dst].add(v_sum)
    return s + delta_s, v + delta_v


# ----------------------------- test harness ----------------------------------
if __name__ == "__main__":
    def run_case(key, N, F, R, E, cutoff, num_cores):
        ks = jax.random.split(key, 12)
        s = jax.random.normal(ks[0], (N, F), dtype=jnp.float32)
        v = jax.random.normal(ks[1], (N, 3, F), dtype=jnp.float32)
        edge_indexes = jax.random.randint(ks[2], (E, 2), 0, N, dtype=jnp.int32)
        r_ij = jax.random.normal(ks[3], (E, 3), dtype=jnp.float32)
        distance = jax.random.uniform(ks[4], (E,), minval=0.5, maxval=6.0, dtype=jnp.float32)

        def lin_init(kw, kb, fan_in, shape_w, shape_b):
            bound = 1.0 / jnp.sqrt(fan_in)
            w = jax.random.uniform(kw, shape_w, minval=-bound, maxval=bound, dtype=jnp.float32)
            b = jax.random.uniform(kb, shape_b, minval=-bound, maxval=bound, dtype=jnp.float32)
            return w, b

        w1, b1 = lin_init(ks[5], ks[6], F, (F, F), (F,))
        w2, b2 = lin_init(ks[7], ks[8], F, (F, 3 * F), (3 * F,))
        wW, bW = lin_init(ks[9], ks[10], R, (R, 3 * F), (3 * F,))
        params = {"w1": w1, "b1": b1, "w2": w2, "b2": b2, "wW": wW, "bW": bW}

        new_s, new_v = message_layer(s, v, edge_indexes, r_ij, distance, params, cutoff,
                                     num_cores=num_cores)
        jax.block_until_ready((new_s, new_v))

        ref_s, ref_v = message_layer_ref(s, v, edge_indexes, r_ij, distance, params, cutoff)
        # bf16 operands on the MXU gather/scatter path (f32 accumulation) ->
        # slightly relaxed tolerance versus the pure-f32 reference.
        assert jnp.allclose(new_s, ref_s, atol=2e-2, rtol=2e-2), "scalar feature mismatch"
        assert jnp.allclose(new_v, ref_v, atol=2e-2, rtol=2e-2), "vector feature mismatch"

    key0 = jax.random.PRNGKey(0)
    k_small, k_tiled, k_cores = jax.random.split(key0, 3)
    # small case: single E-tile
    run_case(k_small, N=8, F=32, R=16, E=16, cutoff=5.0, num_cores=1)
    # tiled case: exercises the E-grid accumulation and N/E/F padding paths
    run_case(k_tiled, N=10, F=32, R=16, E=300, cutoff=5.0, num_cores=1)
    # dual-core (v7x) partial-accumulator path; on 1-TC chips the 'parallel'
    # leading axis is just a serial loop, so this also validates on v5e/v6e.
    run_case(k_cores, N=10, F=32, R=20, E=300, cutoff=5.0, num_cores=2)

    print("KERNEL_OK")
</pallas_src>

<mosaic_0001>
module attributes {stable_mosaic.version = 11 : i64} {
  func.func @_message_kernel(%arg0: i32, %arg1: i32, %arg2: memref<8x512xf32, #tpu.memory_space<vmem>>, %arg3: memref<8x640xbf16, #tpu.memory_space<vmem>>, %arg4: memref<16x1xi32, #tpu.memory_space<vmem>>, %arg5: memref<1x16xi32, #tpu.memory_space<vmem>>, %arg6: memref<16x3xf32, #tpu.memory_space<vmem>>, %arg7: memref<16x1xf32, #tpu.memory_space<vmem>>, %arg8: memref<1x16xf32, #tpu.memory_space<vmem>>, %arg9: memref<16x256xf32, #tpu.memory_space<vmem>>, %arg10: memref<1x256xf32, #tpu.memory_space<vmem>>, %arg11: memref<1x8x512xf32, #tpu.memory_space<vmem>>, %arg12: memref<8x512xf32, #tpu.memory_space<vmem>>) attributes {dimension_semantics = [#tpu.dimension_semantics<parallel>, #tpu.dimension_semantics<arbitrary>], iteration_bounds = array<i64: 1, 1>, scalar_prefetch = 0 : i64, scratch_operands = 1 : i64, tpu.core_type = #tpu.core_type<tc>, window_params = [{pipeline_mode = #tpu.pipeline_mode<synchronous>, transform_indices = @transform_0, window_bounds = array<i64: 8, 512>}, {pipeline_mode = #tpu.pipeline_mode<synchronous>, transform_indices = @transform_1, window_bounds = array<i64: 8, 640>}, {transform_indices = @transform_2, window_bounds = array<i64: 16, 1>}, {transform_indices = @transform_3, window_bounds = array<i64: 1, 16>}, {transform_indices = @transform_4, window_bounds = array<i64: 16, 3>}, {transform_indices = @transform_5, window_bounds = array<i64: 16, 1>}, {transform_indices = @transform_6, window_bounds = array<i64: 1, 16>}, {pipeline_mode = #tpu.pipeline_mode<synchronous>, transform_indices = @transform_7, window_bounds = array<i64: 16, 256>}, {pipeline_mode = #tpu.pipeline_mode<synchronous>, transform_indices = @transform_8, window_bounds = array<i64: 1, 256>}, {pipeline_mode = #tpu.pipeline_mode<synchronous>, transform_indices = @transform_9, window_bounds = array<i64: 1, 8, 512>}]} {
    %c0_i32 = arith.constant 0 : i32
    %0 = arith.cmpi eq, %arg1, %c0_i32 : i32
    %c0_i32_0 = arith.constant 0 : i32
    %1 = arith.cmpi eq, %arg1, %c0_i32_0 : i32
    %2 = arith.extui %1 : i1 to i32
    %c0_i32_1 = arith.constant 0 : i32
    %3 = arith.cmpi ne, %2, %c0_i32_1 : i32
    scf.if %3 {
      %cst_33 = arith.constant 0.000000e+00 : f32
      %93 = vector.broadcast %cst_33 : f32 to vector<8x512xf32>
      %c0_34 = arith.constant 0 : index
      %c0_35 = arith.constant 0 : index
      %94 = vector.load %arg12[%c0_34, %c0_35] : memref<8x512xf32, #tpu.memory_space<vmem>>, vector<8x512xf32>
      tpu.vector_store %arg12[%c0_34, %c0_35], %93 {strides = array<i32>} : memref<8x512xf32, #tpu.memory_space<vmem>>, vector<8x512xf32>,
    } else {
    }
    %c0 = arith.constant 0 : index
    %c0_2 = arith.constant 0 : index
    %4 = vector.load %arg7[%c0, %c0_2] : memref<16x1xf32, #tpu.memory_space<vmem>>, vector<16x1xf32>
    %5 = tpu.reciprocal %4 {approx = true} : vector<16x1xf32> -> vector<16x1xf32>
    %6 = tpu.iota {dimensions = array<i32: 0>} : vector<16x16xi32>
    %c1_i32 = arith.constant 1 : i32
    %7 = vector.broadcast %c1_i32 : i32 to vector<16x16xi32>
    %8 = arith.addi %6, %7 : vector<16x16xi32>
    %9 = arith.sitofp %8 : vector<16x16xi32> to vector<16x16xf32>
    %c0_3 = arith.constant 0 : index
    %c0_4 = arith.constant 0 : index
    %10 = vector.load %arg8[%c0_3, %c0_4] : memref<1x16xf32, #tpu.memory_space<vmem>>, vector<1x16xf32>
    %cst = arith.constant 0.628318548 : f32
    %11 = vector.broadcast %cst : f32 to vector<1x16xf32>
    %12 = arith.mulf %10, %11 : vector<1x16xf32>
    %13 = vector.broadcast %12 : vector<1x16xf32> to vector<16x16xf32>
    %14 = arith.mulf %13, %9 : vector<16x16xf32>
    %15 = math.sin %14 : vector<16x16xf32>
    %c0_5 = arith.constant 0 : index
    %c0_6 = arith.constant 0 : index
    %16 = vector.load %arg9[%c0_5, %c0_6] : memref<16x256xf32, #tpu.memory_space<vmem>>, vector<16x256xf32>
    %cst_7 = arith.constant dense<0.000000e+00> : vector<16x256xf32>
    %17 = tpu.matmul %15, %16, %cst_7 {dimension_numbers = #tpu.dot_dimension_numbers<[0], [0], [1], [1], [0, 1, 1, 1], [], []>} : vector<16x16xf32>, vector<16x256xf32>, vector<16x256xf32> -> vector<16x256xf32>
    %cst_8 = arith.constant 5.000000e+00 : f32
    %18 = vector.broadcast %cst_8 : f32 to vector<16x1xf32>
    %19 = arith.cmpf olt, %4, %18 : vector<16x1xf32>
    %cst_9 = arith.constant 0.628318548 : f32
    %20 = vector.broadcast %cst_9 : f32 to vector<16x1xf32>
    %21 = arith.mulf %20, %4 : vector<16x1xf32>
    %22 = math.cos %21 : vector<16x1xf32>
    %cst_10 = arith.constant 1.000000e+00 : f32
    %23 = vector.broadcast %cst_10 : f32 to vector<16x1xf32>
    %24 = arith.addf %22, %23 : vector<16x1xf32>
    %cst_11 = arith.constant 5.000000e-01 : f32
    %25 = vector.broadcast %cst_11 : f32 to vector<16x1xf32>
    %26 = arith.mulf %25, %24 : vector<16x1xf32>
    %cst_12 = arith.constant 0.000000e+00 : f32
    %27 = vector.broadcast %cst_12 : f32 to vector<16x1xf32>
    %28 = arith.select %19, %26, %27 : vector<16x1xi1>, vector<16x1xf32>
    %29 = vector.broadcast %5 : vector<16x1xf32> to vector<16x256xf32>
    %30 = arith.mulf %17, %29 : vector<16x256xf32>
    %c0_13 = arith.constant 0 : index
    %c0_14 = arith.constant 0 : index
    %31 = vector.load %arg10[%c0_13, %c0_14] : memref<1x256xf32, #tpu.memory_space<vmem>>, vector<1x256xf32>
    %32 = vector.broadcast %31 : vector<1x256xf32> to vector<16x256xf32>
    %33 = arith.addf %30, %32 : vector<16x256xf32>
    %34 = vector.broadcast %28 : vector<16x1xf32> to vector<16x256xf32>
    %35 = arith.mulf %33, %34 : vector<16x256xf32>
    %36 = tpu.iota {dimensions = array<i32: 1>} : vector<16x8xi32>
    %c0_15 = arith.constant 0 : index
    %c0_16 = arith.constant 0 : index
    %37 = vector.load %arg4[%c0_15, %c0_16] : memref<16x1xi32, #tpu.memory_space<vmem>>, vector<16x1xi32>
    %38 = vector.broadcast %37 : vector<16x1xi32> to vector<16x8xi32>
    %39 = arith.cmpi eq, %38, %36 : vector<16x8xi32>
    %40 = arith.extui %39 : vector<16x8xi1> to vector<16x8xi32>
    %41 = arith.sitofp %40 : vector<16x8xi32> to vector<16x8xf32>
    %42 = arith.truncf %41 : vector<16x8xf32> to vector<16x8xbf16>
    %43 = tpu.iota {dimensions = array<i32: 0>} : vector<8x16xi32>
    %c0_17 = arith.constant 0 : index
    %c0_18 = arith.constant 0 : index
    %44 = vector.load %arg5[%c0_17, %c0_18] : memref<1x16xi32, #tpu.memory_space<vmem>>, vector<1x16xi32>
    %45 = vector.broadcast %44 : vector<1x16xi32> to vector<8x16xi32>
    %46 = arith.cmpi eq, %43, %45 : vector<8x16xi32>
    %47 = arith.extui %46 : vector<8x16xi1> to vector<8x16xi32>
    %48 = arith.sitofp %47 : vector<8x16xi32> to vector<8x16xf32>
    %49 = arith.truncf %48 : vector<8x16xf32> to vector<8x16xbf16>
    %c0_19 = arith.constant 0 : index
    %c0_20 = arith.constant 0 : index
    %50 = vector.load %arg3[%c0_19, %c0_20] : memref<8x640xbf16, #tpu.memory_space<vmem>>, vector<8x640xbf16>
    %cst_21 = arith.constant dense<0.000000e+00> : vector<16x640xf32>
    %51 = tpu.matmul %42, %50, %cst_21 {dimension_numbers = #tpu.dot_dimension_numbers<[1], [0], [0], [1], [0, 0, 1, 1], [], []>} : vector<16x8xbf16>, vector<8x640xbf16>, vector<16x640xf32> -> vector<16x640xf32>
    %52 = vector.extract_strided_slice %51 {offsets = [0, 0], sizes = [16, 256], strides = [1, 1]} : vector<16x640xf32> to vector<16x256xf32>
    %53 = vector.extract_strided_slice %51 {offsets = [0, 256], sizes = [16, 384], strides = [1, 1]} : vector<16x640xf32> to vector<16x384xf32>
    %54 = arith.mulf %35, %52 : vector<16x256xf32>
    %55 = vector.extract_strided_slice %54 {offsets = [0, 0], sizes = [16, 128], strides = [1, 1]} : vector<16x256xf32> to vector<16x128xf32>
    %56 = vector.extract_strided_slice %54 {offsets = [0, 128], sizes = [16, 128], strides = [1, 1]} : vector<16x256xf32> to vector<16x128xf32>
    %c0_22 = arith.constant 0 : index
    %c0_23 = arith.constant 0 : index
    %57 = vector.load %arg6[%c0_22, %c0_23] : memref<16x3xf32, #tpu.memory_space<vmem>>, vector<16x3xf32>
    %58 = vector.broadcast %5 : vector<16x1xf32> to vector<16x3xf32>
    %59 = arith.mulf %57, %58 : vector<16x3xf32>
    %60 = vector.extract_strided_slice %53 {offsets = [0, 0], sizes = [16, 128], strides = [1, 1]} : vector<16x384xf32> to vector<16x128xf32>
    %61 = arith.mulf %60, %55 : vector<16x128xf32>
    %62 = vector.extract_strided_slice %59 {offsets = [0, 0], sizes = [16, 1], strides = [1, 1]} : vector<16x3xf32> to vector<16x1xf32>
    %63 = vector.broadcast %62 : vector<16x1xf32> to vector<16x128xf32>
    %64 = arith.mulf %56, %63 : vector<16x128xf32>
    %65 = arith.addf %61, %64 : vector<16x128xf32>
    %66 = vector.extract_strided_slice %53 {offsets = [0, 128], sizes = [16, 128], strides = [1, 1]} : vector<16x384xf32> to vector<16x128xf32>
    %67 = arith.mulf %66, %55 : vector<16x128xf32>
    %68 = vector.extract_strided_slice %59 {offsets = [0, 1], sizes = [16, 1], strides = [1, 1]} : vector<16x3xf32> to vector<16x1xf32>
    %69 = vector.broadcast %68 : vector<16x1xf32> to vector<16x128xf32>
    %70 = arith.mulf %56, %69 : vector<16x128xf32>
    %71 = arith.addf %67, %70 : vector<16x128xf32>
    %72 = vector.extract_strided_slice %53 {offsets = [0, 256], sizes = [16, 128], strides = [1, 1]} : vector<16x384xf32> to vector<16x128xf32>
    %73 = arith.mulf %72, %55 : vector<16x128xf32>
    %74 = vector.extract_strided_slice %59 {offsets = [0, 2], sizes = [16, 1], strides = [1, 1]} : vector<16x3xf32> to vector<16x1xf32>
    %75 = vector.broadcast %74 : vector<16x1xf32> to vector<16x128xf32>
    %76 = arith.mulf %56, %75 : vector<16x128xf32>
    %77 = arith.addf %73, %76 : vector<16x128xf32>
    %78 = tpu.concatenate %65, %71, %77 in 1 : vector<16x128xf32>, vector<16x128xf32>, vector<16x128xf32> -> vector<16x384xf32>
    %79 = tpu.concatenate %56, %78 in 1 : vector<16x128xf32>, vector<16x384xf32> -> vector<16x512xf32>
    %80 = arith.truncf %79 : vector<16x512xf32> to vector<16x512xbf16>
    %c0_24 = arith.constant 0 : index
    %c0_25 = arith.constant 0 : index
    %81 = vector.load %arg12[%c0_24, %c0_25] : memref<8x512xf32, #tpu.memory_space<vmem>>, vector<8x512xf32>
    %cst_26 = arith.constant dense<0.000000e+00> : vector<8x512xf32>
    %82 = tpu.matmul %49, %80, %cst_26 {dimension_numbers = #tpu.dot_dimension_numbers<[1], [0], [0], [1], [0, 0, 1, 1], [], []>} : vector<8x16xbf16>, vector<16x512xbf16>, vector<8x512xf32> -> vector<8x512xf32>
    %83 = arith.addf %81, %82 : vector<8x512xf32>
    %c0_27 = arith.constant 0 : index
    %c0_28 = arith.constant 0 : index
    %84 = vector.load %arg12[%c0_27, %c0_28] : memref<8x512xf32, #tpu.memory_space<vmem>>, vector<8x512xf32>
    tpu.vector_store %arg12[%c0_27, %c0_28], %83 {strides = array<i32>} : memref<8x512xf32, #tpu.memory_space<vmem>>, vector<8x512xf32>,
    %c0_i32_29 = arith.constant 0 : i32
    %85 = arith.cmpi eq, %arg0, %c0_i32_29 : i32
    %86 = arith.andi %0, %85 : i1
    %87 = arith.extui %86 : i1 to i32
    %c0_i32_30 = arith.constant 0 : i32
    %88 = arith.cmpi ne, %87, %c0_i32_30 : i32
    scf.if %88 {
      %c0_33 = arith.constant 0 : index
      %c0_34 = arith.constant 0 : index
      %93 = vector.load %arg2[%c0_33, %c0_34] : memref<8x512xf32, #tpu.memory_space<vmem>>, vector<8x512xf32>
      %c0_35 = arith.constant 0 : index
      %c0_36 = arith.constant 0 : index
      %94 = vector.load %arg12[%c0_35, %c0_36] : memref<8x512xf32, #tpu.memory_space<vmem>>, vector<8x512xf32>
      %95 = arith.addf %93, %94 : vector<8x512xf32>
      %c0_37 = arith.constant 0 : index
      %c0_38 = arith.constant 0 : index
      %c0_39 = arith.constant 0 : index
      %96 = vector.load %arg11[%c0_37, %c0_38, %c0_39] : memref<1x8x512xf32, #tpu.memory_space<vmem>>, vector<1x8x512xf32>
      %97 = vector.shape_cast %96 : vector<1x8x512xf32> to vector<8x512xf32>
      %98 = vector.shape_cast %95 : vector<8x512xf32> to vector<1x8x512xf32>
      tpu.vector_store %arg11[%c0_37, %c0_38, %c0_39], %98 {strides = array<i32>} : memref<1x8x512xf32, #tpu.memory_space<vmem>>, vector<1x8x512xf32>,
    } else {
    }
    %c0_i32_31 = arith.constant 0 : i32
    %89 = arith.cmpi sgt, %arg0, %c0_i32_31 : i32
    %90 = arith.andi %0, %89 : i1
    %91 = arith.extui %90 : i1 to i32
    %c0_i32_32 = arith.constant 0 : i32
    %92 = arith.cmpi ne, %91, %c0_i32_32 : i32
    scf.if %92 {
      %c0_33 = arith.constant 0 : index
      %c0_34 = arith.constant 0 : index
      %93 = vector.load %arg12[%c0_33, %c0_34] : memref<8x512xf32, #tpu.memory_space<vmem>>, vector<8x512xf32>
      %c0_35 = arith.constant 0 : index
      %c0_36 = arith.constant 0 : index
      %c0_37 = arith.constant 0 : index
      %94 = vector.load %arg11[%c0_35, %c0_36, %c0_37] : memref<1x8x512xf32, #tpu.memory_space<vmem>>, vector<1x8x512xf32>
      %95 = vector.shape_cast %94 : vector<1x8x512xf32> to vector<8x512xf32>
      %96 = vector.shape_cast %93 : vector<8x512xf32> to vector<1x8x512xf32>
      tpu.vector_store %arg11[%c0_35, %c0_36, %c0_37], %96 {strides = array<i32>} : memref<1x8x512xf32, #tpu.memory_space<vmem>>, vector<1x8x512xf32>,
    } else {
    }
    return
  }
  func.func @transform_0(%arg0: i32, %arg1: i32) -> (i32, i32) {
    %c0_i32 = arith.constant 0 : i32
    %c0_i32_0 = arith.constant 0 : i32
    %c0_i32_1 = arith.constant 0 : i32
    return %c0_i32, %c0_i32_0 : i32, i32
  }
  func.func @transform_1(%arg0: i32, %arg1: i32) -> (i32, i32) {
    %c0_i32 = arith.constant 0 : i32
    %c0_i32_0 = arith.constant 0 : i32
    %c0_i32_1 = arith.constant 0 : i32
    return %c0_i32, %c0_i32_0 : i32, i32
  }
  func.func @transform_2(%arg0: i32, %arg1: i32) -> (i32, i32) {
    %c1_i32 = arith.constant 1 : i32
    %0 = arith.muli %arg0, %c1_i32 : i32
    %1 = arith.addi %0, %arg1 : i32
    %c0_i32 = arith.constant 0 : i32
    %c0_i32_0 = arith.constant 0 : i32
    return %1, %c0_i32 : i32, i32
  }
  func.func @transform_3(%arg0: i32, %arg1: i32) -> (i32, i32) {
    %c1_i32 = arith.constant 1 : i32
    %0 = arith.muli %arg0, %c1_i32 : i32
    %1 = arith.addi %0, %arg1 : i32
    %c0_i32 = arith.constant 0 : i32
    %c0_i32_0 = arith.constant 0 : i32
    return %c0_i32, %1 : i32, i32
  }
  func.func @transform_4(%arg0: i32, %arg1: i32) -> (i32, i32) {
    %c1_i32 = arith.constant 1 : i32
    %0 = arith.muli %arg0, %c1_i32 : i32
    %1 = arith.addi %0, %arg1 : i32
    %c0_i32 = arith.constant 0 : i32
    %c0_i32_0 = arith.constant 0 : i32
    return %1, %c0_i32 : i32, i32
  }
  func.func @transform_5(%arg0: i32, %arg1: i32) -> (i32, i32) {
    %c1_i32 = arith.constant 1 : i32
    %0 = arith.muli %arg0, %c1_i32 : i32
    %1 = arith.addi %0, %arg1 : i32
    %c0_i32 = arith.constant 0 : i32
    %c0_i32_0 = arith.constant 0 : i32
    return %1, %c0_i32 : i32, i32
  }
  func.func @transform_6(%arg0: i32, %arg1: i32) -> (i32, i32) {
    %c1_i32 = arith.constant 1 : i32
    %0 = arith.muli %arg0, %c1_i32 : i32
    %1 = arith.addi %0, %arg1 : i32
    %c0_i32 = arith.constant 0 : i32
    %c0_i32_0 = arith.constant 0 : i32
    return %c0_i32, %1 : i32, i32
  }
  func.func @transform_7(%arg0: i32, %arg1: i32) -> (i32, i32) {
    %c0_i32 = arith.constant 0 : i32
    %c0_i32_0 = arith.constant 0 : i32
    %c0_i32_1 = arith.constant 0 : i32
    return %c0_i32, %c0_i32_0 : i32, i32
  }
  func.func @transform_8(%arg0: i32, %arg1: i32) -> (i32, i32) {
    %c0_i32 = arith.constant 0 : i32
    %c0_i32_0 = arith.constant 0 : i32
    %c0_i32_1 = arith.constant 0 : i32
    return %c0_i32, %c0_i32_0 : i32, i32
  }
  func.func @transform_9(%arg0: i32, %arg1: i32) -> (i32, i32, i32) {
    %c0_i32 = arith.constant 0 : i32
    %c0_i32_0 = arith.constant 0 : i32
    %c0_i32_1 = arith.constant 0 : i32
    return %arg0, %c0_i32, %c0_i32_0 : i32, i32, i32
  }
}

module attributes {stable_mosaic.version = 11 : i64} {
  func.func @_message_kernel(%arg0: i32, %arg1: i32, %arg2: memref<8x512xf32, #tpu.memory_space<vmem>>, %arg3: memref<8x640xbf16, #tpu.memory_space<vmem>>, %arg4: memref<16x1xi32, #tpu.memory_space<vmem>>, %arg5: memref<1x16xi32, #tpu.memory_space<vmem>>, %arg6: memref<16x3xf32, #tpu.memory_space<vmem>>, %arg7: memref<16x1xf32, #tpu.memory_space<vmem>>, %arg8: memref<1x16xf32, #tpu.memory_space<vmem>>, %arg9: memref<16x256xf32, #tpu.memory_space<vmem>>, %arg10: memref<1x256xf32, #tpu.memory_space<vmem>>, %arg11: memref<1x8x512xf32, #tpu.memory_space<vmem>>, %arg12: memref<8x512xf32, #tpu.memory_space<vmem>>) attributes {dimension_semantics = [#tpu.dimension_semantics<parallel>, #tpu.dimension_semantics<arbitrary>], iteration_bounds = array<i64: 1, 1>, scalar_prefetch = 0 : i64, scratch_operands = 1 : i64, tpu.core_type = #tpu.core_type<tc>, window_params = [{pipeline_mode = #tpu.pipeline_mode<synchronous>, transform_indices = @transform_0, window_bounds = array<i64: 8, 512>}, {pipeline_mode = #tpu.pipeline_mode<synchronous>, transform_indices = @transform_1, window_bounds = array<i64: 8, 640>}, {transform_indices = @transform_2, window_bounds = array<i64: 16, 1>}, {transform_indices = @transform_3, window_bounds = array<i64: 1, 16>}, {transform_indices = @transform_4, window_bounds = array<i64: 16, 3>}, {transform_indices = @transform_5, window_bounds = array<i64: 16, 1>}, {transform_indices = @transform_6, window_bounds = array<i64: 1, 16>}, {pipeline_mode = #tpu.pipeline_mode<synchronous>, transform_indices = @transform_7, window_bounds = array<i64: 16, 256>}, {pipeline_mode = #tpu.pipeline_mode<synchronous>, transform_indices = @transform_8, window_bounds = array<i64: 1, 256>}, {transform_indices = @transform_9, window_bounds = array<i64: 1, 8, 512>}]} {
    %c0_i32 = arith.constant 0 : i32
    %0 = arith.cmpi eq, %arg1, %c0_i32 : i32
    %c0_i32_0 = arith.constant 0 : i32
    %1 = arith.cmpi eq, %arg1, %c0_i32_0 : i32
    %2 = arith.extui %1 : i1 to i32
    %c0_i32_1 = arith.constant 0 : i32
    %3 = arith.cmpi ne, %2, %c0_i32_1 : i32
    scf.if %3 {
      %cst_33 = arith.constant 0.000000e+00 : f32
      %93 = vector.broadcast %cst_33 : f32 to vector<8x512xf32>
      %c0_34 = arith.constant 0 : index
      %c0_35 = arith.constant 0 : index
      %94 = vector.load %arg12[%c0_34, %c0_35] : memref<8x512xf32, #tpu.memory_space<vmem>>, vector<8x512xf32>
      tpu.vector_store %arg12[%c0_34, %c0_35], %93 {strides = array<i32>} : memref<8x512xf32, #tpu.memory_space<vmem>>, vector<8x512xf32>,
    } else {
    }
    %c0 = arith.constant 0 : index
    %c0_2 = arith.constant 0 : index
    %4 = vector.load %arg7[%c0, %c0_2] : memref<16x1xf32, #tpu.memory_space<vmem>>, vector<16x1xf32>
    %5 = tpu.reciprocal %4 {approx = true} : vector<16x1xf32> -> vector<16x1xf32>
    %6 = tpu.iota {dimensions = array<i32: 0>} : vector<16x16xi32>
    %c1_i32 = arith.constant 1 : i32
    %7 = vector.broadcast %c1_i32 : i32 to vector<16x16xi32>
    %8 = arith.addi %6, %7 : vector<16x16xi32>
    %9 = arith.sitofp %8 : vector<16x16xi32> to vector<16x16xf32>
    %c0_3 = arith.constant 0 : index
    %c0_4 = arith.constant 0 : index
    %10 = vector.load %arg8[%c0_3, %c0_4] : memref<1x16xf32, #tpu.memory_space<vmem>>, vector<1x16xf32>
    %cst = arith.constant 0.628318548 : f32
    %11 = vector.broadcast %cst : f32 to vector<1x16xf32>
    %12 = arith.mulf %10, %11 : vector<1x16xf32>
    %13 = vector.broadcast %12 : vector<1x16xf32> to vector<16x16xf32>
    %14 = arith.mulf %13, %9 : vector<16x16xf32>
    %15 = math.sin %14 : vector<16x16xf32>
    %c0_5 = arith.constant 0 : index
    %c0_6 = arith.constant 0 : index
    %16 = vector.load %arg9[%c0_5, %c0_6] : memref<16x256xf32, #tpu.memory_space<vmem>>, vector<16x256xf32>
    %cst_7 = arith.constant dense<0.000000e+00> : vector<16x256xf32>
    %17 = tpu.matmul %15, %16, %cst_7 {dimension_numbers = #tpu.dot_dimension_numbers<[0], [0], [1], [1], [0, 1, 1, 1], [], []>} : vector<16x16xf32>, vector<16x256xf32>, vector<16x256xf32> -> vector<16x256xf32>
    %cst_8 = arith.constant 5.000000e+00 : f32
    %18 = vector.broadcast %cst_8 : f32 to vector<16x1xf32>
    %19 = arith.cmpf olt, %4, %18 : vector<16x1xf32>
    %cst_9 = arith.constant 0.628318548 : f32
    %20 = vector.broadcast %cst_9 : f32 to vector<16x1xf32>
    %21 = arith.mulf %20, %4 : vector<16x1xf32>
    %22 = math.cos %21 : vector<16x1xf32>
    %cst_10 = arith.constant 1.000000e+00 : f32
    %23 = vector.broadcast %cst_10 : f32 to vector<16x1xf32>
    %24 = arith.addf %22, %23 : vector<16x1xf32>
    %cst_11 = arith.constant 5.000000e-01 : f32
    %25 = vector.broadcast %cst_11 : f32 to vector<16x1xf32>
    %26 = arith.mulf %25, %24 : vector<16x1xf32>
    %cst_12 = arith.constant 0.000000e+00 : f32
    %27 = vector.broadcast %cst_12 : f32 to vector<16x1xf32>
    %28 = arith.select %19, %26, %27 : vector<16x1xi1>, vector<16x1xf32>
    %29 = vector.broadcast %5 : vector<16x1xf32> to vector<16x256xf32>
    %30 = arith.mulf %17, %29 : vector<16x256xf32>
    %c0_13 = arith.constant 0 : index
    %c0_14 = arith.constant 0 : index
    %31 = vector.load %arg10[%c0_13, %c0_14] : memref<1x256xf32, #tpu.memory_space<vmem>>, vector<1x256xf32>
    %32 = vector.broadcast %31 : vector<1x256xf32> to vector<16x256xf32>
    %33 = arith.addf %30, %32 : vector<16x256xf32>
    %34 = vector.broadcast %28 : vector<16x1xf32> to vector<16x256xf32>
    %35 = arith.mulf %33, %34 : vector<16x256xf32>
    %36 = tpu.iota {dimensions = array<i32: 1>} : vector<16x8xi32>
    %c0_15 = arith.constant 0 : index
    %c0_16 = arith.constant 0 : index
    %37 = vector.load %arg4[%c0_15, %c0_16] : memref<16x1xi32, #tpu.memory_space<vmem>>, vector<16x1xi32>
    %38 = vector.broadcast %37 : vector<16x1xi32> to vector<16x8xi32>
    %39 = arith.cmpi eq, %38, %36 : vector<16x8xi32>
    %40 = arith.extui %39 : vector<16x8xi1> to vector<16x8xi32>
    %41 = arith.sitofp %40 : vector<16x8xi32> to vector<16x8xf32>
    %42 = arith.truncf %41 : vector<16x8xf32> to vector<16x8xbf16>
    %43 = tpu.iota {dimensions = array<i32: 0>} : vector<8x16xi32>
    %c0_17 = arith.constant 0 : index
    %c0_18 = arith.constant 0 : index
    %44 = vector.load %arg5[%c0_17, %c0_18] : memref<1x16xi32, #tpu.memory_space<vmem>>, vector<1x16xi32>
    %45 = vector.broadcast %44 : vector<1x16xi32> to vector<8x16xi32>
    %46 = arith.cmpi eq, %43, %45 : vector<8x16xi32>
    %47 = arith.extui %46 : vector<8x16xi1> to vector<8x16xi32>
    %48 = arith.sitofp %47 : vector<8x16xi32> to vector<8x16xf32>
    %49 = arith.truncf %48 : vector<8x16xf32> to vector<8x16xbf16>
    %c0_19 = arith.constant 0 : index
    %c0_20 = arith.constant 0 : index
    %50 = vector.load %arg3[%c0_19, %c0_20] : memref<8x640xbf16, #tpu.memory_space<vmem>>, vector<8x640xbf16>
    %cst_21 = arith.constant dense<0.000000e+00> : vector<16x640xf32>
    %51 = tpu.matmul %42, %50, %cst_21 {dimension_numbers = #tpu.dot_dimension_numbers<[1], [0], [0], [1], [0, 0, 1, 1], [], []>} : vector<16x8xbf16>, vector<8x640xbf16>, vector<16x640xf32> -> vector<16x640xf32>
    %52 = vector.extract_strided_slice %51 {offsets = [0, 0], sizes = [16, 256], strides = [1, 1]} : vector<16x640xf32> to vector<16x256xf32>
    %53 = vector.extract_strided_slice %51 {offsets = [0, 256], sizes = [16, 384], strides = [1, 1]} : vector<16x640xf32> to vector<16x384xf32>
    %54 = arith.mulf %35, %52 : vector<16x256xf32>
    %55 = vector.extract_strided_slice %54 {offsets = [0, 0], sizes = [16, 128], strides = [1, 1]} : vector<16x256xf32> to vector<16x128xf32>
    %56 = vector.extract_strided_slice %54 {offsets = [0, 128], sizes = [16, 128], strides = [1, 1]} : vector<16x256xf32> to vector<16x128xf32>
    %c0_22 = arith.constant 0 : index
    %c0_23 = arith.constant 0 : index
    %57 = vector.load %arg6[%c0_22, %c0_23] : memref<16x3xf32, #tpu.memory_space<vmem>>, vector<16x3xf32>
    %58 = vector.broadcast %5 : vector<16x1xf32> to vector<16x3xf32>
    %59 = arith.mulf %57, %58 : vector<16x3xf32>
    %60 = vector.extract_strided_slice %53 {offsets = [0, 0], sizes = [16, 128], strides = [1, 1]} : vector<16x384xf32> to vector<16x128xf32>
    %61 = arith.mulf %60, %55 : vector<16x128xf32>
    %62 = vector.extract_strided_slice %59 {offsets = [0, 0], sizes = [16, 1], strides = [1, 1]} : vector<16x3xf32> to vector<16x1xf32>
    %63 = vector.broadcast %62 : vector<16x1xf32> to vector<16x128xf32>
    %64 = arith.mulf %56, %63 : vector<16x128xf32>
    %65 = arith.addf %61, %64 : vector<16x128xf32>
    %66 = vector.extract_strided_slice %53 {offsets = [0, 128], sizes = [16, 128], strides = [1, 1]} : vector<16x384xf32> to vector<16x128xf32>
    %67 = arith.mulf %66, %55 : vector<16x128xf32>
    %68 = vector.extract_strided_slice %59 {offsets = [0, 1], sizes = [16, 1], strides = [1, 1]} : vector<16x3xf32> to vector<16x1xf32>
    %69 = vector.broadcast %68 : vector<16x1xf32> to vector<16x128xf32>
    %70 = arith.mulf %56, %69 : vector<16x128xf32>
    %71 = arith.addf %67, %70 : vector<16x128xf32>
    %72 = vector.extract_strided_slice %53 {offsets = [0, 256], sizes = [16, 128], strides = [1, 1]} : vector<16x384xf32> to vector<16x128xf32>
    %73 = arith.mulf %72, %55 : vector<16x128xf32>
    %74 = vector.extract_strided_slice %59 {offsets = [0, 2], sizes = [16, 1], strides = [1, 1]} : vector<16x3xf32> to vector<16x1xf32>
    %75 = vector.broadcast %74 : vector<16x1xf32> to vector<16x128xf32>
    %76 = arith.mulf %56, %75 : vector<16x128xf32>
    %77 = arith.addf %73, %76 : vector<16x128xf32>
    %78 = tpu.concatenate %65, %71, %77 in 1 : vector<16x128xf32>, vector<16x128xf32>, vector<16x128xf32> -> vector<16x384xf32>
    %79 = tpu.concatenate %56, %78 in 1 : vector<16x128xf32>, vector<16x384xf32> -> vector<16x512xf32>
    %80 = arith.truncf %79 : vector<16x512xf32> to vector<16x512xbf16>
    %c0_24 = arith.constant 0 : index
    %c0_25 = arith.constant 0 : index
    %81 = vector.load %arg12[%c0_24, %c0_25] : memref<8x512xf32, #tpu.memory_space<vmem>>, vector<8x512xf32>
    %cst_26 = arith.constant dense<0.000000e+00> : vector<8x512xf32>
    %82 = tpu.matmul %49, %80, %cst_26 {dimension_numbers = #tpu.dot_dimension_numbers<[1], [0], [0], [1], [0, 0, 1, 1], [], []>} : vector<8x16xbf16>, vector<16x512xbf16>, vector<8x512xf32> -> vector<8x512xf32>
    %83 = arith.addf %81, %82 : vector<8x512xf32>
    %c0_27 = arith.constant 0 : index
    %c0_28 = arith.constant 0 : index
    %84 = vector.load %arg12[%c0_27, %c0_28] : memref<8x512xf32, #tpu.memory_space<vmem>>, vector<8x512xf32>
    tpu.vector_store %arg12[%c0_27, %c0_28], %83 {strides = array<i32>} : memref<8x512xf32, #tpu.memory_space<vmem>>, vector<8x512xf32>,
    %c0_i32_29 = arith.constant 0 : i32
    %85 = arith.cmpi eq, %arg0, %c0_i32_29 : i32
    %86 = arith.andi %0, %85 : i1
    %87 = arith.extui %86 : i1 to i32
    %c0_i32_30 = arith.constant 0 : i32
    %88 = arith.cmpi ne, %87, %c0_i32_30 : i32
    scf.if %88 {
      %c0_33 = arith.constant 0 : index
      %c0_34 = arith.constant 0 : index
      %93 = vector.load %arg2[%c0_33, %c0_34] : memref<8x512xf32, #tpu.memory_space<vmem>>, vector<8x512xf32>
      %c0_35 = arith.constant 0 : index
      %c0_36 = arith.constant 0 : index
      %94 = vector.load %arg12[%c0_35, %c0_36] : memref<8x512xf32, #tpu.memory_space<vmem>>, vector<8x512xf32>
      %95 = arith.addf %93, %94 : vector<8x512xf32>
      %c0_37 = arith.constant 0 : index
      %c0_38 = arith.constant 0 : index
      %c0_39 = arith.constant 0 : index
      %96 = vector.load %arg11[%c0_37, %c0_38, %c0_39] : memref<1x8x512xf32, #tpu.memory_space<vmem>>, vector<1x8x512xf32>
      %97 = vector.shape_cast %96 : vector<1x8x512xf32> to vector<8x512xf32>
      %98 = vector.shape_cast %95 : vector<8x512xf32> to vector<1x8x512xf32>
      tpu.vector_store %arg11[%c0_37, %c0_38, %c0_39], %98 {strides = array<i32>} : memref<1x8x512xf32, #tpu.memory_space<vmem>>, vector<1x8x512xf32>,
    } else {
    }
    %c0_i32_31 = arith.constant 0 : i32
    %89 = arith.cmpi sgt, %arg0, %c0_i32_31 : i32
    %90 = arith.andi %0, %89 : i1
    %91 = arith.extui %90 : i1 to i32
    %c0_i32_32 = arith.constant 0 : i32
    %92 = arith.cmpi ne, %91, %c0_i32_32 : i32
    scf.if %92 {
      %c0_33 = arith.constant 0 : index
      %c0_34 = arith.constant 0 : index
      %93 = vector.load %arg12[%c0_33, %c0_34] : memref<8x512xf32, #tpu.memory_space<vmem>>, vector<8x512xf32>
      %c0_35 = arith.constant 0 : index
      %c0_36 = arith.constant 0 : index
      %c0_37 = arith.constant 0 : index
      %94 = vector.load %arg11[%c0_35, %c0_36, %c0_37] : memref<1x8x512xf32, #tpu.memory_space<vmem>>, vector<1x8x512xf32>
      %95 = vector.shape_cast %94 : vector<1x8x512xf32> to vector<8x512xf32>
      %96 = vector.shape_cast %93 : vector<8x512xf32> to vector<1x8x512xf32>
      tpu.vector_store %arg11[%c0_35, %c0_36, %c0_37], %96 {strides = array<i32>} : memref<1x8x512xf32, #tpu.memory_space<vmem>>, vector<1x8x512xf32>,
    } else {
    }
    return
  }
  func.func @transform_0(%arg0: i32, %arg1: i32) -> (i32, i32) {
    %c0_i32 = arith.constant 0 : i32
    %c0_i32_0 = arith.constant 0 : i32
    %c0_i32_1 = arith.constant 0 : i32
    return %c0_i32, %c0_i32_0 : i32, i32
  }
  func.func @transform_1(%arg0: i32, %arg1: i32) -> (i32, i32) {
    %c0_i32 = arith.constant 0 : i32
    %c0_i32_0 = arith.constant 0 : i32
    %c0_i32_1 = arith.constant 0 : i32
    return %c0_i32, %c0_i32_0 : i32, i32
  }
  func.func @transform_2(%arg0: i32, %arg1: i32) -> (i32, i32) {
    %c1_i32 = arith.constant 1 : i32
    %0 = arith.muli %arg0, %c1_i32 : i32
    %1 = arith.addi %0, %arg1 : i32
    %c0_i32 = arith.constant 0 : i32
    %c0_i32_0 = arith.constant 0 : i32
    return %1, %c0_i32 : i32, i32
  }
  func.func @transform_3(%arg0: i32, %arg1: i32) -> (i32, i32) {
    %c1_i32 = arith.constant 1 : i32
    %0 = arith.muli %arg0, %c1_i32 : i32
    %1 = arith.addi %0, %arg1 : i32
    %c0_i32 = arith.constant 0 : i32
    %c0_i32_0 = arith.constant 0 : i32
    return %c0_i32, %1 : i32, i32
  }
  func.func @transform_4(%arg0: i32, %arg1: i32) -> (i32, i32) {
    %c1_i32 = arith.constant 1 : i32
    %0 = arith.muli %arg0, %c1_i32 : i32
    %1 = arith.addi %0, %arg1 : i32
    %c0_i32 = arith.constant 0 : i32
    %c0_i32_0 = arith.constant 0 : i32
    return %1, %c0_i32 : i32, i32
  }
  func.func @transform_5(%arg0: i32, %arg1: i32) -> (i32, i32) {
    %c1_i32 = arith.constant 1 : i32
    %0 = arith.muli %arg0, %c1_i32 : i32
    %1 = arith.addi %0, %arg1 : i32
    %c0_i32 = arith.constant 0 : i32
    %c0_i32_0 = arith.constant 0 : i32
    return %1, %c0_i32 : i32, i32
  }
  func.func @transform_6(%arg0: i32, %arg1: i32) -> (i32, i32) {
    %c1_i32 = arith.constant 1 : i32
    %0 = arith.muli %arg0, %c1_i32 : i32
    %1 = arith.addi %0, %arg1 : i32
    %c0_i32 = arith.constant 0 : i32
    %c0_i32_0 = arith.constant 0 : i32
    return %c0_i32, %1 : i32, i32
  }
  func.func @transform_7(%arg0: i32, %arg1: i32) -> (i32, i32) {
    %c0_i32 = arith.constant 0 : i32
    %c0_i32_0 = arith.constant 0 : i32
    %c0_i32_1 = arith.constant 0 : i32
    return %c0_i32, %c0_i32_0 : i32, i32
  }
  func.func @transform_8(%arg0: i32, %arg1: i32) -> (i32, i32) {
    %c0_i32 = arith.constant 0 : i32
    %c0_i32_0 = arith.constant 0 : i32
    %c0_i32_1 = arith.constant 0 : i32
    return %c0_i32, %c0_i32_0 : i32, i32
  }
  func.func @transform_9(%arg0: i32, %arg1: i32) -> (i32, i32, i32) {
    %c0_i32 = arith.constant 0 : i32
    %c0_i32_0 = arith.constant 0 : i32
    %c0_i32_1 = arith.constant 0 : i32
    return %arg0, %c0_i32, %c0_i32_0 : i32, i32, i32
  }
}

</mosaic_0001>

<llo_original>
// kernel: tpu_custom_call.1
$region0: #{tpu_custom_call.1}
  #allocation0 [shape = 'u32[]', space=smem, size = 0x4, offset = 0x4, fixed_abs, tag = 'smem constant byte address 0x4 - core index']
  #allocation1 [shape = 'u32[72,128]{1,0:T(1,128)}', space=vmem, size = 0x9000, scoped, tag = 'internal scratch']
  #allocation2 [shape = 'f32[8,512]{1,0:T(8,128)}', space=vmem, size = 0x4000, scoped, tag = 'scratch operand']
  %s0 = inlined_call_operand.vmem [shape: f32[8,512], index: 0, kind: input, shape index: {}]
  %s1 = inlined_call_operand.hbm [shape: bf16[8,640], index: 1, kind: input, shape index: {}]
  %s2 = inlined_call_operand.vmem [shape: s32[16,1], index: 2, kind: input, shape index: {}]
  %s3 = inlined_call_operand.vmem [shape: s32[1,16], index: 3, kind: input, shape index: {}]
  %s4 = inlined_call_operand.vmem [shape: f32[16,3], index: 4, kind: input, shape index: {}]
  %s5 = inlined_call_operand.vmem [shape: f32[16,1], index: 5, kind: input, shape index: {}]
  %s6 = inlined_call_operand.vmem [shape: f32[1,16], index: 6, kind: input, shape index: {}]
  %s7 = inlined_call_operand.hbm [shape: f32[16,256], index: 7, kind: input, shape index: {}]
  %s8 = inlined_call_operand.vmem [shape: f32[1,256], index: 8, kind: input, shape index: {}]
  %s9 = inlined_call_operand.hbm [shape: f32[1,8,512], index: 9, kind: output, shape index: {}]
  %s10 = sld [smem:[#allocation0]]
  $region66: #{tpu_custom_call.1} parent=0
    _
  %s12 = ssub.s32 1, %s10
  %s13 = scalar_select 0, %s12, %s10
  $region1: #{tpu_custom_call.1} parent=0
    #allocation3 [shape = 'u8[10240]{0}', space=vmem, size = 0x2800, scoped, tag = 'input window, operand 1, single buffered']
    #allocation4 [shape = 's32[1]{0}', space=sflag, size = 0x4, scoped, tag = 'scoped memory for tpu_custom_call.1']
    #allocation5 [shape = 's32[1]{0}', space=sflag, size = 0x4, scoped, tag = 'scoped memory for tpu_custom_call.1']
    #allocation6 [shape = 'u8[16384]{0}', space=vmem, size = 0x4000, scoped, tag = 'input window, operand 7, single buffered']
    #allocation7 [shape = 's32[1]{0}', space=sflag, size = 0x4, scoped, tag = 'scoped memory for tpu_custom_call.1']
    #allocation8 [shape = 'u8[16384]{0}', space=vmem, size = 0x4000, scoped, tag = 'output window, operand 0, single buffered']
    %14 = vsyncpa [#allocation4], 0
    %15 = vsyncpa [#allocation7], 0
    %16 = vsyncpa [#allocation5], 0
    // Predicated region
    $region2: #{tpu_custom_call.1} parent=1 // pred_check
      _
    $region3: #{tpu_custom_call.1} parent=1 // pred_check_branch
      %18 = sbr.rel (0) target = $region5
    $region4: #{tpu_custom_call.1} parent=1 // pred_region
      _
    $region5: #{tpu_custom_call.1} parent=1 // pred_fallthru
      _
    // Predicated region
    $region6: #{tpu_custom_call.1} parent=1 // pred_check
      _
    $region7: #{tpu_custom_call.1} parent=1 // pred_check_branch
      %20 = sbr.rel (0) target = $region9
    $region8: #{tpu_custom_call.1} parent=1 // pred_region
      %22 = vsyncadd [#allocation4], 0
      %s24 = sshll.u32 %s1, 4
      %s25 = int_to_ptr.hbm [resolvable:$true] %s24
      %s26 = sshll.u32 [#allocation3], 4
      %s27 = int_to_ptr.vmem [resolvable:$true] %s26
      %29 = dma.hbm_to_vmem [thread:$0]  %s25, 320, %s27, [#allocation4]
    $region9: #{tpu_custom_call.1} parent=1 // pred_fallthru
      _
    // Predicated region
    $region10: #{tpu_custom_call.1} parent=1 // pred_check
      _
    $region11: #{tpu_custom_call.1} parent=1 // pred_check_branch
      %31 = sbr.rel (0) target = $region13
    $region12: #{tpu_custom_call.1} parent=1 // pred_region
      %s32 = sadd.s32 0, 0
      %s33 = smul.u32 2, %s32
      %p34 = scmp.lt.s32.totalorder %s33, 1
      %s35 = scalar_select %p34, %s33, 1
      %s36 = smul.addr %s35, 8
      %s37 = scalar_lea.vmem %s2, %s36
      %s38 = sadd.s32 0, 0
      %s39 = smul.u32 2, %s38
    $region13: #{tpu_custom_call.1} parent=1 // pred_fallthru
      _
    // Predicated region
    $region14: #{tpu_custom_call.1} parent=1 // pred_check
      _
    $region15: #{tpu_custom_call.1} parent=1 // pred_check_branch
      %41 = sbr.rel (0) target = $region17
    $region16: #{tpu_custom_call.1} parent=1 // pred_region
      %s42 = sadd.s32 0, 0
      %p43 = scmp.lt.s32.totalorder %s42, 0
      %s44 = scalar_select %p43, %s42, 0
      %s45 = scalar_lea.vmem %s3, %s44
      %s46 = sadd.s32 0, 0
    $region17: #{tpu_custom_call.1} parent=1 // pred_fallthru
      _
    // Predicated region
    $region18: #{tpu_custom_call.1} parent=1 // pred_check
      _
    $region19: #{tpu_custom_call.1} parent=1 // pred_check_branch
      %48 = sbr.rel (0) target = $region21
    $region20: #{tpu_custom_call.1} parent=1 // pred_region
      %s49 = sadd.s32 0, 0
      %s50 = smul.u32 2, %s49
      %p51 = scmp.lt.s32.totalorder %s50, 1
      %s52 = scalar_select %p51, %s50, 1
      %s53 = smul.addr %s52, 8
      %s54 = scalar_lea.vmem %s4, %s53
      %s55 = sadd.s32 0, 0
      %s56 = smul.u32 2, %s55
    $region21: #{tpu_custom_call.1} parent=1 // pred_fallthru
      _
    // Predicated region
    $region22: #{tpu_custom_call.1} parent=1 // pred_check
      _
    $region23: #{tpu_custom_call.1} parent=1 // pred_check_branch
      %58 = sbr.rel (0) target = $region25
    $region24: #{tpu_custom_call.1} parent=1 // pred_region
      %s59 = sadd.s32 0, 0
      %s60 = smul.u32 2, %s59
      %p61 = scmp.lt.s32.totalorder %s60, 1
      %s62 = scalar_select %p61, %s60, 1
      %s63 = smul.addr %s62, 8
      %s64 = scalar_lea.vmem %s5, %s63
      %s65 = sadd.s32 0, 0
      %s66 = smul.u32 2, %s65
    $region25: #{tpu_custom_call.1} parent=1 // pred_fallthru
      _
    // Predicated region
    $region26: #{tpu_custom_call.1} parent=1 // pred_check
      _
    $region27: #{tpu_custom_call.1} parent=1 // pred_check_branch
      %68 = sbr.rel (0) target = $region29
    $region28: #{tpu_custom_call.1} parent=1 // pred_region
      %s69 = sadd.s32 0, 0
      %p70 = scmp.lt.s32.totalorder %s69, 0
      %s71 = scalar_select %p70, %s69, 0
      %s72 = scalar_lea.vmem %s6, %s71
      %s73 = sadd.s32 0, 0
    $region29: #{tpu_custom_call.1} parent=1 // pred_fallthru
      _
    // Predicated region
    $region30: #{tpu_custom_call.1} parent=1 // pred_check
      _
    $region31: #{tpu_custom_call.1} parent=1 // pred_check_branch
      %75 = sbr.rel (0) target = $region33
    $region32: #{tpu_custom_call.1} parent=1 // pred_region
      %77 = vsyncadd [#allocation7], 0
      %s78 = sshll.u32 %s7, 4
      %s79 = int_to_ptr.hbm [resolvable:$true] %s78
      %s80 = sshll.u32 [#allocation6], 4
      %s81 = int_to_ptr.vmem [resolvable:$true] %s80
      %86 = dma.hbm_to_vmem [thread:$0]  %s79, 512, %s81, [#allocation7], 256, 256, 16
    $region33: #{tpu_custom_call.1} parent=1 // pred_fallthru
      _
    // Predicated region
    $region34: #{tpu_custom_call.1} parent=1 // pred_check
      _
    $region35: #{tpu_custom_call.1} parent=1 // pred_check_branch
      %88 = sbr.rel (0) target = $region37
    $region36: #{tpu_custom_call.1} parent=1 // pred_region
      _
    $region37: #{tpu_custom_call.1} parent=1 // pred_fallthru
      _
    // Predicated region
    $region38: #{tpu_custom_call.1} parent=1 // pred_check
      _
    $region39: #{tpu_custom_call.1} parent=1 // pred_check_branch
      %90 = sbr.rel (0) target = $region41
    $region40: #{tpu_custom_call.1} parent=1 // pred_region
      %92 = dma.done [#allocation4], 320
    $region41: #{tpu_custom_call.1} parent=1 // pred_fallthru
      _
    // Predicated region
    $region42: #{tpu_custom_call.1} parent=1 // pred_check
      _
    $region43: #{tpu_custom_call.1} parent=1 // pred_check_branch
      %94 = sbr.rel (0) target = $region45
    $region44: #{tpu_custom_call.1} parent=1 // pred_region
      %96 = dma.done [#allocation7], 512
    $region45: #{tpu_custom_call.1} parent=1 // pred_fallthru
      _
    %s97 = sadd.s32 0, 0
    %s98 = smul.u32 2, %s97
    %p99 = scmp.lt.s32.totalorder %s98, 1
    %s100 = scalar_select %p99, %s98, 1
    %s101 = smul.addr %s100, 8
    %s102 = scalar_lea.vmem %s2, %s101
    %s103 = sadd.s32 0, 0
    %p104 = scmp.lt.s32.totalorder %s103, 0
    %s105 = scalar_select %p104, %s103, 0
    %s106 = scalar_lea.vmem %s3, %s105
    %s107 = sadd.s32 0, 0
    %s108 = smul.u32 2, %s107
    %p109 = scmp.lt.s32.totalorder %s108, 1
    %s110 = scalar_select %p109, %s108, 1
    %s111 = smul.addr %s110, 8
    %s112 = scalar_lea.vmem %s4, %s111
    %s113 = sadd.s32 0, 0
    %s114 = smul.u32 2, %s113
    %p115 = scmp.lt.s32.totalorder %s114, 1
    %s116 = scalar_select %p115, %s114, 1
    %s117 = smul.addr %s116, 8
    %s118 = scalar_lea.vmem %s5, %s117
    %s119 = sadd.s32 0, 0
    %p120 = scmp.lt.s32.totalorder %s119, 0
    %s121 = scalar_select %p120, %s119, 0
    %s122 = scalar_lea.vmem %s6, %s121
    %s123 = sadd.s32 0, 0
    %s124 = smul.u32 2, %s123
    %p125 = scmp.lt.s32.totalorder %s124, 1
    %s126 = scalar_select %p125, %s124, 1
    %s127 = smul.addr %s126, 8
    %s128 = scalar_lea.vmem %s2, %s127
    %s129 = sadd.s32 0, 0
    %s130 = smul.u32 2, %s129
    %s131 = sadd.s32 0, 0
    %p132 = scmp.lt.s32.totalorder %s131, 0
    %s133 = scalar_select %p132, %s131, 0
    %s134 = scalar_lea.vmem %s3, %s133
    %s135 = sadd.s32 0, 0
    %s136 = sadd.s32 0, 0
    %s137 = smul.u32 2, %s136
    %p138 = scmp.lt.s32.totalorder %s137, 1
    %s139 = scalar_select %p138, %s137, 1
    %s140 = smul.addr %s139, 8
    %s141 = scalar_lea.vmem %s4, %s140
    %s142 = sadd.s32 0, 0
    %s143 = smul.u32 2, %s142
    %s144 = sadd.s32 0, 0
    %s145 = smul.u32 2, %s144
    %p146 = scmp.lt.s32.totalorder %s145, 1
    %s147 = scalar_select %p146, %s145, 1
    %s148 = smul.addr %s147, 8
    %s149 = scalar_lea.vmem %s5, %s148
    %s150 = sadd.s32 0, 0
    %s151 = smul.u32 2, %s150
    %s152 = sadd.s32 0, 0
    %p153 = scmp.lt.s32.totalorder %s152, 0
    %s154 = scalar_select %p153, %s152, 0
    %s155 = scalar_lea.vmem %s6, %s154
    %s156 = sadd.s32 0, 0
    %p158 = scmp.eq.s32.totalorder 0, 0
    // Predicated region
    $region46: #{tpu_custom_call.1} parent=1 // pred_check
      %p159 = pneg %p158
    $region47: #{tpu_custom_call.1} parent=1 // pred_check_branch
      %161 = sbr.rel (%p159) target = $region49
    $region48: #{tpu_custom_call.1} parent=1 // pred_region
      %162 = vst [vmem:[#allocation2] sm:$0xff] 0.0
      %163 = vst [vmem:[#allocation2 + $0x8] sm:$0xff] 0.0
      %164 = vst [vmem:[#allocation2 + $0x10] sm:$0xff] 0.0
      %165 = vst [vmem:[#allocation2 + $0x18] sm:$0xff] 0.0
    $region49: #{tpu_custom_call.1} parent=1 // pred_fallthru
      _
    %v166 = vld [vmem:[%s149] sm:$0xff]
    %v167 = vld [vmem:[%s149 + $0x8] sm:$0xff]
    %v168 = vrcp.pop %v166
    %v169 = vrcp.pop %v167
    %v170 = vlaneseq
    %v171 = vshrl.u32 %v170, 7
    %v172 = vadd.s32 %v171, 8
    %v173 = vadd.s32 %v171, 1
    %v174 = vadd.s32 %v172, 1
    %v175 = vcvt.s32.f32 %v173
    %v176 = vcvt.s32.f32 %v174
    %v177 = vld [vmem:[%s155] sm:$0x1]
    %v178 = vmul.f32 %v177, 0.62831855
    %v180 = vperm.slane %v178, 0
    %v182 = vmul.f32 %v180, %v175
    %v183 = vmul.f32 %v180, %v176
    %v184 = vand.u32 2147483647, %v182
    %vm185 = vcmp.le.f32.partialorder %v184, 0.7853982
    %vm186 = vcmp.lt.s32.totalorder %v182, 0
    %v187 = vand.u32 %v182, 2139095040
    %v188 = vshrl.u32 %v187, 23
    %v189 = vsub.s32 %v188, 127
    %v190 = vand.u32 2147483647, %v182
    %v191 = vand.u32 %v190, 8388607
    %v192 = vor.u32 %v191, 8388608
    %v193 = vsub.s32 0, %v192
    %v194 = vadd.s32 %v189, 1
    %vm195 = vcmp.gt.s32.totalorder %v194, 0
    %v196 = vsel %vm195, %v194, 0
    %v197 = vshrl.u32 %v196, 5
    %v198 = vand.u32 %v196, 31
    %v199 = vsub.s32 32, %v198
    %v200 = vshrl.u32 683565275, %v199
    %v201 = vshll.u32 683565275, %v198
    %v202 = vshrl.u32 2475754826, %v199
    %v203 = vor.u32 %v201, %v202
    %v204 = vshll.u32 2475754826, %v198
    %v205 = vshrl.u32 2131351028, %v199
    %v206 = vor.u32 %v204, %v205
    %v207 = vshll.u32 2131351028, %v198
    %v208 = vshrl.u32 2102212464, %v199
    %v209 = vor.u32 %v207, %v208
    %v210 = vshll.u32 2102212464, %v198
    %v211 = vshrl.u32 920167782, %v199
    %v212 = vor.u32 %v210, %v211
    %v213 = vshll.u32 920167782, %v198
    %v214 = vshrl.u32 1326507024, %v199
    %v215 = vor.u32 %v213, %v214
    %vm216 = vcmp.lt.s32.totalorder %v197, 1
    %vm217 = vcmp.lt.s32.totalorder %v197, 2
    %vm218 = vcmp.lt.s32.totalorder %v197, 3
    %vm219 = vcmp.lt.s32.totalorder %v197, 4
    %v220 = vsel %vm216, %v200, %v203
    %v221 = vsel %vm219, %v209, 2102212464
    %v222 = vsel %vm218, %v206, %v221
    %v223 = vsel %vm217, %v220, %v222
    %v224 = vsel %vm216, %v203, %v206
    %v225 = vsel %vm219, %v212, 920167782
    %v226 = vsel %vm218, %v209, %v225
    %v227 = vsel %vm217, %v224, %v226
    %v228 = vsel %vm216, %v206, %v209
    %v229 = vsel %vm219, %v215, 1326507024
    %v230 = vsel %vm218, %v212, %v229
    %v231 = vsel %vm217, %v228, %v230
    %v232 = vshll.u32 %v192, 8
    %v233 = vand.u32 %v232, 65535
    %v234 = vshrl.u32 %v232, 16
    %v235 = vand.u32 %v231, 65535
    %v236 = vshrl.u32 %v231, 16
    %v237 = vmul.u32 %v233, %v235
    %v238 = vmul.u32 %v233, %v236
    %v239 = vmul.u32 %v234, %v235
    %v240 = vmul.u32 %v234, %v236
    %v241 = vshll.u32 %v238, 16
    %v242 = vshrl.u32 %v238, 16
    %v243 = vshll.u32 %v239, 16
    %v244 = vshrl.u32 %v239, 16
    %vm245 = vc.u32 %v237, %v241
    %v246 = vsel %vm245, 1, 0
    %v247 = vadd.s32 %v237, %v241
    %v248 = vadd.s32 %v240, %v246
    %vm249 = vc.u32 %v247, %v243
    %v250 = vsel %vm249, 1, 0
    %v251 = vadd.s32 %v247, %v243
    %v252 = vadd.s32 %v248, %v250
    %v253 = vadd.s32 %v252, %v242
    %v254 = vadd.s32 %v253, %v244
    %v255 = vand.u32 %v232, 65535
    %v256 = vshrl.u32 %v232, 16
    %v257 = vand.u32 %v227, 65535
    %v258 = vshrl.u32 %v227, 16
    %v259 = vmul.u32 %v255, %v257
    %v260 = vmul.u32 %v255, %v258
    %v261 = vmul.u32 %v256, %v257
    %v262 = vmul.u32 %v256, %v258
    %v263 = vshll.u32 %v260, 16
    %v264 = vshrl.u32 %v260, 16
    %v265 = vshll.u32 %v261, 16
    %v266 = vshrl.u32 %v261, 16
    %vm267 = vc.u32 %v259, %v263
    %v268 = vsel %vm267, 1, 0
    %v269 = vadd.s32 %v259, %v263
    %v270 = vadd.s32 %v262, %v268
    %vm271 = vc.u32 %v269, %v265
    %v272 = vsel %vm271, 1, 0
    %v273 = vadd.s32 %v269, %v265
    %v274 = vadd.s32 %v270, %v272
    %v275 = vadd.s32 %v274, %v264
    %v276 = vadd.s32 %v275, %v266
    %v277 = vmul.u32 %v232, %v223
    %v278 = vadd.s32 %v254, %v273
    %vm279 = vc.u32 %v254, %v273
    %v280 = vadd.s32 %v276, 1
    %v281 = vsel %vm279, %v280, %v276
    %v282 = vadd.s32 %v277, %v281
    %v283 = vadd.s32 %v282, 536870912
    %v284 = vshrl.u32 %v283, 30
    %v285 = vshll.u32 %v284, 30
    %v286 = vsub.s32 %v282, %v285
    %vm287 = vcmp.lt.s32.totalorder %v286, 0
    %v288 = vsub.s32 0, %v286
    %v289 = vsel %vm287, %v288, %v286
    %v290 = vclz %v289
    %v291 = vsub.s32 %v290, 2
    %vm292 = vcmp.gt.s32.totalorder 0, %v291
    %v293 = vsel %vm292, 0, %v291
    %v294 = vsub.s32 32, %v293
    %v295 = vshll.u32 %v286, %v293
    %v296 = vshrl.u32 %v278, %v294
    %v297 = vor.u32 %v295, %v296
    %v298 = vsub.s32 4294967266, %v293
    %v299 = vadd.s32 %v298, 127
    %v300 = vshll.u32 %v299, 23
    %v301 = vor.u32 4788187, %v300
    %v302 = vand.u32 2147483647, %v301
    %v304 = vcvt.s32.f32 %v297
    %v305 = vmul.f32 %v304, %v302
    %v306 = vxor.u32 %v305, 2147483648
    %v307 = vsel %vm186, %v306, %v305
    %v308 = vsub.s32 4, %v284
    %v309 = vsel %vm186, %v308, %v284
    %v310 = vsel %vm185, %v182, %v307
    %v311 = vsel %vm185, 0, %v309
    %v312 = vmul.f32 %v310, %v310
    %v313 = vmul.f32 %v312, -0.001358992
    %v314 = vadd.f32 %v313, 0.041655596
    %v315 = vmul.f32 %v312, %v314
    %v316 = vadd.f32 %v315, -0.4999988
    %v317 = vmul.f32 %v312, %v316
    %v318 = vadd.f32 1.0, %v317
    %v319 = vmul.f32 %v310, %v310
    %v320 = vmul.f32 %v319, -0.00019511016
    %v321 = vadd.f32 %v320, 0.008332121
    %v322 = vmul.f32 %v319, %v321
    %v323 = vadd.f32 %v322, -0.16666654
    %v324 = vmul.f32 %v319, %v323
    %v325 = vadd.f32 %v324, 1.0
    %v326 = vmul.f32 %v325, %v310
    %vm327 = vweird.f32 %v182
    %v328 = vadd.s32 %v311, 3
    %v329 = vand.u32 %v328, 3
    %vm330 = vcmp.lt.s32.totalorder %v329, 2
    %vm331 = vcmp.eq.s32.totalorder %v329, 0
    %v332 = vxor.u32 %v326, 2147483648
    %v333 = vsel %vm331, %v318, %v332
    %vm334 = vcmp.eq.s32.totalorder %v329, 2
    %v335 = vxor.u32 %v318, 2147483648
    %v336 = vsel %vm334, %v335, %v326
    %v337 = vsel %vm330, %v333, %v336
    %v338 = vsel %vm327, nan, %v337
    %v339 = vand.u32 2147483647, %v183
    %vm340 = vcmp.le.f32.partialorder %v339, 0.7853982
    %vm341 = vcmp.lt.s32.totalorder %v183, 0
    %v342 = vand.u32 %v183, 2139095040
    %v343 = vshrl.u32 %v342, 23
    %v344 = vsub.s32 %v343, 127
    %v345 = vand.u32 2147483647, %v183
    %v346 = vand.u32 %v345, 8388607
    %v347 = vor.u32 %v346, 8388608
    %v348 = vsub.s32 0, %v347
    %v349 = vadd.s32 %v344, 1
    %vm350 = vcmp.gt.s32.totalorder %v349, 0
    %v351 = vsel %vm350, %v349, 0
    %v352 = vshrl.u32 %v351, 5
    %v353 = vand.u32 %v351, 31
    %v354 = vsub.s32 32, %v353
    %v355 = vshrl.u32 683565275, %v354
    %v356 = vshll.u32 683565275, %v353
    %v357 = vshrl.u32 2475754826, %v354
    %v358 = vor.u32 %v356, %v357
    %v359 = vshll.u32 2475754826, %v353
    %v360 = vshrl.u32 2131351028, %v354
    %v361 = vor.u32 %v359, %v360
    %v362 = vshll.u32 2131351028, %v353
    %v363 = vshrl.u32 2102212464, %v354
    %v364 = vor.u32 %v362, %v363
    %v365 = vshll.u32 2102212464, %v353
    %v366 = vshrl.u32 920167782, %v354
    %v367 = vor.u32 %v365, %v366
    %v368 = vshll.u32 920167782, %v353
    %v369 = vshrl.u32 1326507024, %v354
    %v370 = vor.u32 %v368, %v369
    %vm371 = vcmp.lt.s32.totalorder %v352, 1
    %vm372 = vcmp.lt.s32.totalorder %v352, 2
    %vm373 = vcmp.lt.s32.totalorder %v352, 3
    %vm374 = vcmp.lt.s32.totalorder %v352, 4
    %v375 = vsel %vm371, %v355, %v358
    %v376 = vsel %vm374, %v364, 2102212464
    %v377 = vsel %vm373, %v361, %v376
    %v378 = vsel %vm372, %v375, %v377
    %v379 = vsel %vm371, %v358, %v361
    %v380 = vsel %vm374, %v367, 920167782
    %v381 = vsel %vm373, %v364, %v380
    %v382 = vsel %vm372, %v379, %v381
    %v383 = vsel %vm371, %v361, %v364
    %v384 = vsel %vm374, %v370, 1326507024
    %v385 = vsel %vm373, %v367, %v384
    %v386 = vsel %vm372, %v383, %v385
    %v387 = vshll.u32 %v347, 8
    %v388 = vand.u32 %v387, 65535
    %v389 = vshrl.u32 %v387, 16
    %v390 = vand.u32 %v386, 65535
    %v391 = vshrl.u32 %v386, 16
    %v392 = vmul.u32 %v388, %v390
    %v393 = vmul.u32 %v388, %v391
    %v394 = vmul.u32 %v389, %v390
    %v395 = vmul.u32 %v389, %v391
    %v396 = vshll.u32 %v393, 16
    %v397 = vshrl.u32 %v393, 16
    %v398 = vshll.u32 %v394, 16
    %v399 = vshrl.u32 %v394, 16
    %vm400 = vc.u32 %v392, %v396
    %v401 = vsel %vm400, 1, 0
    %v402 = vadd.s32 %v392, %v396
    %v403 = vadd.s32 %v395, %v401
    %vm404 = vc.u32 %v402, %v398
    %v405 = vsel %vm404, 1, 0
    %v406 = vadd.s32 %v402, %v398
    %v407 = vadd.s32 %v403, %v405
    %v408 = vadd.s32 %v407, %v397
    %v409 = vadd.s32 %v408, %v399
    %v410 = vand.u32 %v387, 65535
    %v411 = vshrl.u32 %v387, 16
    %v412 = vand.u32 %v382, 65535
    %v413 = vshrl.u32 %v382, 16
    %v414 = vmul.u32 %v410, %v412
    %v415 = vmul.u32 %v410, %v413
    %v416 = vmul.u32 %v411, %v412
    %v417 = vmul.u32 %v411, %v413
    %v418 = vshll.u32 %v415, 16
    %v419 = vshrl.u32 %v415, 16
    %v420 = vshll.u32 %v416, 16
    %v421 = vshrl.u32 %v416, 16
    %vm422 = vc.u32 %v414, %v418
    %v423 = vsel %vm422, 1, 0
    %v424 = vadd.s32 %v414, %v418
    %v425 = vadd.s32 %v417, %v423
    %vm426 = vc.u32 %v424, %v420
    %v427 = vsel %vm426, 1, 0
    %v428 = vadd.s32 %v424, %v420
    %v429 = vadd.s32 %v425, %v427
    %v430 = vadd.s32 %v429, %v419
    %v431 = vadd.s32 %v430, %v421
    %v432 = vmul.u32 %v387, %v378
    %v433 = vadd.s32 %v409, %v428
    %vm434 = vc.u32 %v409, %v428
    %v435 = vadd.s32 %v431, 1
    %v436 = vsel %vm434, %v435, %v431
    %v437 = vadd.s32 %v432, %v436
    %v438 = vadd.s32 %v437, 536870912
    %v439 = vshrl.u32 %v438, 30
    %v440 = vshll.u32 %v439, 30
    %v441 = vsub.s32 %v437, %v440
    %vm442 = vcmp.lt.s32.totalorder %v441, 0
    %v443 = vsub.s32 0, %v441
    %v444 = vsel %vm442, %v443, %v441
    %v445 = vclz %v444
    %v446 = vsub.s32 %v445, 2
    %vm447 = vcmp.gt.s32.totalorder 0, %v446
    %v448 = vsel %vm447, 0, %v446
    %v449 = vsub.s32 32, %v448
    %v450 = vshll.u32 %v441, %v448
    %v451 = vshrl.u32 %v433, %v449
    %v452 = vor.u32 %v450, %v451
    %v453 = vsub.s32 4294967266, %v448
    %v454 = vadd.s32 %v453, 127
    %v455 = vshll.u32 %v454, 23
    %v456 = vor.u32 4788187, %v455
    %v457 = vand.u32 2147483647, %v456
    %v459 = vcvt.s32.f32 %v452
    %v460 = vmul.f32 %v459, %v457
    %v461 = vxor.u32 %v460, 2147483648
    %v462 = vsel %vm341, %v461, %v460
    %v463 = vsub.s32 4, %v439
    %v464 = vsel %vm341, %v463, %v439
    %v465 = vsel %vm340, %v183, %v462
    %v466 = vsel %vm340, 0, %v464
    %v467 = vmul.f32 %v465, %v465
    %v468 = vmul.f32 %v467, -0.001358992
    %v469 = vadd.f32 %v468, 0.041655596
    %v470 = vmul.f32 %v467, %v469
    %v471 = vadd.f32 %v470, -0.4999988
    %v472 = vmul.f32 %v467, %v471
    %v473 = vadd.f32 1.0, %v472
    %v474 = vmul.f32 %v465, %v465
    %v475 = vmul.f32 %v474, -0.00019511016
    %v476 = vadd.f32 %v475, 0.008332121
    %v477 = vmul.f32 %v474, %v476
    %v478 = vadd.f32 %v477, -0.16666654
    %v479 = vmul.f32 %v474, %v478
    %v480 = vadd.f32 %v479, 1.0
    %v481 = vmul.f32 %v480, %v465
    %vm482 = vweird.f32 %v183
    %v483 = vadd.s32 %v466, 3
    %v484 = vand.u32 %v483, 3
    %vm485 = vcmp.lt.s32.totalorder %v484, 2
    %vm486 = vcmp.eq.s32.totalorder %v484, 0
    %v487 = vxor.u32 %v481, 2147483648
    %v488 = vsel %vm486, %v473, %v487
    %vm489 = vcmp.eq.s32.totalorder %v484, 2
    %v490 = vxor.u32 %v473, 2147483648
    %v491 = vsel %vm489, %v490, %v481
    %v492 = vsel %vm485, %v488, %v491
    %v493 = vsel %vm482, nan, %v492
    %v494 = vld [vmem:[#allocation6] sm:$0xff]
    %v495 = vld [vmem:[#allocation6 + $0x8] sm:$0xff]
    %v496 = vld [vmem:[#allocation6 + $0x10] sm:$0xff]
    %v497 = vld [vmem:[#allocation6 + $0x18] sm:$0xff]
    %498 = vxpose.xlu0.b32.start [1/16] %v338, 128
    %499 = vxpose.xlu0.b32.cont [2/16] %v493, 128
    %500 = vxpose.xlu0.b32.cont [3/16] 0.0, 128
    %501 = vxpose.xlu0.b32.cont [4/16] 0.0, 128
    %502 = vxpose.xlu0.b32.cont [5/16] 0.0, 128
    %503 = vxpose.xlu0.b32.cont [6/16] 0.0, 128
    %504 = vxpose.xlu0.b32.cont [7/16] 0.0, 128
    %505 = vxpose.xlu0.b32.cont [8/16] 0.0, 128
    %506 = vxpose.xlu0.b32.cont [9/16] 0.0, 128
    %507 = vxpose.xlu0.b32.cont [10/16] 0.0, 128
    %508 = vxpose.xlu0.b32.cont [11/16] 0.0, 128
    %509 = vxpose.xlu0.b32.cont [12/16] 0.0, 128
    %510 = vxpose.xlu0.b32.cont [13/16] 0.0, 128
    %511 = vxpose.xlu0.b32.cont [14/16] 0.0, 128
    %512 = vxpose.xlu0.b32.cont [15/16] 0.0, 128
    %513 = vxpose.xlu0.b32.end [16/16] 0.0, 128
    %v514 = vpop.trf.xlu0
    %v515 = vpop.trf.xlu0
    %v516 = vpop.trf.xlu0
    %v517 = vpop.trf.xlu0
    %v518 = vpop.trf.xlu0
    %v519 = vpop.trf.xlu0
    %v520 = vpop.trf.xlu0
    %v521 = vpop.trf.xlu0
    %v522 = vpop.trf.xlu0
    %v523 = vpop.trf.xlu0
    %v524 = vpop.trf.xlu0
    %v525 = vpop.trf.xlu0
    %v526 = vpop.trf.xlu0
    %v527 = vpop.trf.xlu0
    %v528 = vpop.trf.xlu0
    %v529 = vpop.trf.xlu0
    %vm530 = vcmask 130048
    %v532 = vsel %vm530, %v514, 0
    %v535 = vsel %vm530, %v515, 0
    %537 = vmatpush.msra.mxu0 0.0
    %538 = vmatpush.msra.mxu0 0.0
    %539 = vmatpush.msra.mxu0 0.0
    %540 = vmatpush.msra.mxu0 0.0
    %541 = vmatpush.msra.mxu0 0.0
    %542 = vmatpush.msra.mxu0 0.0
    %543 = vmatpush.msra.mxu0 0.0
    %544 = vmatpush.msra.mxu0 0.0
    %545 = vmatpush.msra.mxu0 0.0
    %546 = vmatpush.msra.mxu0 0.0
    %547 = vmatpush.msra.mxu0 0.0
    %548 = vmatpush.msra.mxu0 0.0
    %549 = vmatpush.msra.mxu0 0.0
    %550 = vmatpush.msra.mxu0 0.0
    %551 = vmatpush.msra.mxu0 %v496
    %552 = vmatpush.msra.mxu0 %v494
    %553 = vmatmul.f32.gmra.mxu0 %v532
    %v554 = vpop.f32.mrf.mxu0
    %v555 = vadd.f32 0.0, %v554
    %556 = vmatmul.f32.gmra.mxu0 %v535
    %v557 = vpop.f32.mrf.mxu0
    %v558 = vadd.f32 0.0, %v557
    %559 = vdwg.mxu0
    %560 = vmatpush.msra.mxu0 0.0
    %561 = vmatpush.msra.mxu0 0.0
    %562 = vmatpush.msra.mxu0 0.0
    %563 = vmatpush.msra.mxu0 0.0
    %564 = vmatpush.msra.mxu0 0.0
    %565 = vmatpush.msra.mxu0 0.0
    %566 = vmatpush.msra.mxu0 0.0
    %567 = vmatpush.msra.mxu0 0.0
    %568 = vmatpush.msra.mxu0 0.0
    %569 = vmatpush.msra.mxu0 0.0
    %570 = vmatpush.msra.mxu0 0.0
    %571 = vmatpush.msra.mxu0 0.0
    %572 = vmatpush.msra.mxu0 0.0
    %573 = vmatpush.msra.mxu0 0.0
    %574 = vmatpush.msra.mxu0 %v497
    %575 = vmatpush.msra.mxu0 %v495
    %576 = vmatmul.f32.gmra.mxu0 %v532
    %v577 = vpop.f32.mrf.mxu0
    %v578 = vadd.f32 0.0, %v577
    %579 = vmatmul.f32.gmra.mxu0 %v535
    %v580 = vpop.f32.mrf.mxu0
    %v581 = vadd.f32 0.0, %v580
    %582 = vdwg.mxu0
    %vm583 = vcmp.lt.f32.partialorder %v166, 5.0
    %vm584 = vcmp.lt.f32.partialorder %v167, 5.0
    %v585 = vmul.f32 %v166, 0.62831855
    %v586 = vmul.f32 %v167, 0.62831855
    %v587 = vand.u32 2147483647, %v585
    %vm588 = vcmp.le.f32.partialorder %v587, 0.7853982
    %vm589 = vcmp.lt.s32.totalorder %v585, 0
    %v590 = vand.u32 %v585, 2139095040
    %v591 = vshrl.u32 %v590, 23
    %v592 = vsub.s32 %v591, 127
    %v593 = vand.u32 2147483647, %v585
    %v594 = vand.u32 %v593, 8388607
    %v595 = vor.u32 %v594, 8388608
    %v596 = vsub.s32 0, %v595
    %v597 = vadd.s32 %v592, 1
    %vm598 = vcmp.gt.s32.totalorder %v597, 0
    %v599 = vsel %vm598, %v597, 0
    %v600 = vshrl.u32 %v599, 5
    %v601 = vand.u32 %v599, 31
    %v602 = vsub.s32 32, %v601
    %v603 = vshrl.u32 683565275, %v602
    %v604 = vshll.u32 683565275, %v601
    %v605 = vshrl.u32 2475754826, %v602
    %v606 = vor.u32 %v604, %v605
    %v607 = vshll.u32 2475754826, %v601
    %v608 = vshrl.u32 2131351028, %v602
    %v609 = vor.u32 %v607, %v608
    %v610 = vshll.u32 2131351028, %v601
    %v611 = vshrl.u32 2102212464, %v602
    %v612 = vor.u32 %v610, %v611
    %v613 = vshll.u32 2102212464, %v601
    %v614 = vshrl.u32 920167782, %v602
    %v615 = vor.u32 %v613, %v614
    %v616 = vshll.u32 920167782, %v601
    %v617 = vshrl.u32 1326507024, %v602
    %v618 = vor.u32 %v616, %v617
    %vm619 = vcmp.lt.s32.totalorder %v600, 1
    %vm620 = vcmp.lt.s32.totalorder %v600, 2
    %vm621 = vcmp.lt.s32.totalorder %v600, 3
    %vm622 = vcmp.lt.s32.totalorder %v600, 4
    %v623 = vsel %vm619, %v603, %v606
    %v624 = vsel %vm622, %v612, 2102212464
    %v625 = vsel %vm621, %v609, %v624
    %v626 = vsel %vm620, %v623, %v625
    %v627 = vsel %vm619, %v606, %v609
    %v628 = vsel %vm622, %v615, 920167782
    %v629 = vsel %vm621, %v612, %v628
    %v630 = vsel %vm620, %v627, %v629
    %v631 = vsel %vm619, %v609, %v612
    %v632 = vsel %vm622, %v618, 1326507024
    %v633 = vsel %vm621, %v615, %v632
    %v634 = vsel %vm620, %v631, %v633
    %v635 = vshll.u32 %v595, 8
    %v636 = vand.u32 %v635, 65535
    %v637 = vshrl.u32 %v635, 16
    %v638 = vand.u32 %v634, 65535
    %v639 = vshrl.u32 %v634, 16
    %v640 = vmul.u32 %v636, %v638
    %v641 = vmul.u32 %v636, %v639
    %v642 = vmul.u32 %v637, %v638
    %v643 = vmul.u32 %v637, %v639
    %v644 = vshll.u32 %v641, 16
    %v645 = vshrl.u32 %v641, 16
    %v646 = vshll.u32 %v642, 16
    %v647 = vshrl.u32 %v642, 16
    %vm648 = vc.u32 %v640, %v644
    %v649 = vsel %vm648, 1, 0
    %v650 = vadd.s32 %v640, %v644
    %v651 = vadd.s32 %v643, %v649
    %vm652 = vc.u32 %v650, %v646
    %v653 = vsel %vm652, 1, 0
    %v654 = vadd.s32 %v650, %v646
    %v655 = vadd.s32 %v651, %v653
    %v656 = vadd.s32 %v655, %v645
    %v657 = vadd.s32 %v656, %v647
    %v658 = vand.u32 %v635, 65535
    %v659 = vshrl.u32 %v635, 16
    %v660 = vand.u32 %v630, 65535
    %v661 = vshrl.u32 %v630, 16
    %v662 = vmul.u32 %v658, %v660
    %v663 = vmul.u32 %v658, %v661
    %v664 = vmul.u32 %v659, %v660
    %v665 = vmul.u32 %v659, %v661
    %v666 = vshll.u32 %v663, 16
    %v667 = vshrl.u32 %v663, 16
    %v668 = vshll.u32 %v664, 16
    %v669 = vshrl.u32 %v664, 16
    %vm670 = vc.u32 %v662, %v666
    %v671 = vsel %vm670, 1, 0
    %v672 = vadd.s32 %v662, %v666
    %v673 = vadd.s32 %v665, %v671
    %vm674 = vc.u32 %v672, %v668
    %v675 = vsel %vm674, 1, 0
    %v676 = vadd.s32 %v672, %v668
    %v677 = vadd.s32 %v673, %v675
    %v678 = vadd.s32 %v677, %v667
    %v679 = vadd.s32 %v678, %v669
    %v680 = vmul.u32 %v635, %v626
    %v681 = vadd.s32 %v657, %v676
    %vm682 = vc.u32 %v657, %v676
    %v683 = vadd.s32 %v679, 1
    %v684 = vsel %vm682, %v683, %v679
    %v685 = vadd.s32 %v680, %v684
    %v686 = vadd.s32 %v685, 536870912
    %v687 = vshrl.u32 %v686, 30
    %v688 = vshll.u32 %v687, 30
    %v689 = vsub.s32 %v685, %v688
    %vm690 = vcmp.lt.s32.totalorder %v689, 0
    %v691 = vsub.s32 0, %v689
    %v692 = vsel %vm690, %v691, %v689
    %v693 = vclz %v692
    %v694 = vsub.s32 %v693, 2
    %vm695 = vcmp.gt.s32.totalorder 0, %v694
    %v696 = vsel %vm695, 0, %v694
    %v697 = vsub.s32 32, %v696
    %v698 = vshll.u32 %v689, %v696
    %v699 = vshrl.u32 %v681, %v697
    %v700 = vor.u32 %v698, %v699
    %v701 = vsub.s32 4294967266, %v696
    %v702 = vadd.s32 %v701, 127
    %v703 = vshll.u32 %v702, 23
    %v704 = vor.u32 4788187, %v703
    %v705 = vand.u32 2147483647, %v704
    %v707 = vcvt.s32.f32 %v700
    %v708 = vmul.f32 %v707, %v705
    %v709 = vxor.u32 %v708, 2147483648
    %v710 = vsel %vm589, %v709, %v708
    %v711 = vsub.s32 4, %v687
    %v712 = vsel %vm589, %v711, %v687
    %v713 = vsel %vm588, %v585, %v710
    %v714 = vsel %vm588, 0, %v712
    %v715 = vmul.f32 %v713, %v713
    %v716 = vmul.f32 %v715, -0.001358992
    %v717 = vadd.f32 %v716, 0.041655596
    %v718 = vmul.f32 %v715, %v717
    %v719 = vadd.f32 %v718, -0.4999988
    %v720 = vmul.f32 %v715, %v719
    %v721 = vadd.f32 1.0, %v720
    %v722 = vmul.f32 %v713, %v713
    %v723 = vmul.f32 %v722, -0.00019511016
    %v724 = vadd.f32 %v723, 0.008332121
    %v725 = vmul.f32 %v722, %v724
    %v726 = vadd.f32 %v725, -0.16666654
    %v727 = vmul.f32 %v722, %v726
    %v728 = vadd.f32 %v727, 1.0
    %v729 = vmul.f32 %v728, %v713
    %vm730 = vweird.f32 %v585
    %v731 = vand.u32 %v714, 3
    %vm732 = vcmp.lt.s32.totalorder %v731, 2
    %vm733 = vcmp.eq.s32.totalorder %v731, 0
    %v734 = vxor.u32 %v729, 2147483648
    %v735 = vsel %vm733, %v721, %v734
    %vm736 = vcmp.eq.s32.totalorder %v731, 2
    %v737 = vxor.u32 %v721, 2147483648
    %v738 = vsel %vm736, %v737, %v729
    %v739 = vsel %vm732, %v735, %v738
    %v740 = vsel %vm730, nan, %v739
    %v741 = vand.u32 2147483647, %v586
    %vm742 = vcmp.le.f32.partialorder %v741, 0.7853982
    %vm743 = vcmp.lt.s32.totalorder %v586, 0
    %v744 = vand.u32 %v586, 2139095040
    %v745 = vshrl.u32 %v744, 23
    %v746 = vsub.s32 %v745, 127
    %v747 = vand.u32 2147483647, %v586
    %v748 = vand.u32 %v747, 8388607
    %v749 = vor.u32 %v748, 8388608
    %v750 = vsub.s32 0, %v749
    %v751 = vadd.s32 %v746, 1
    %vm752 = vcmp.gt.s32.totalorder %v751, 0
    %v753 = vsel %vm752, %v751, 0
    %v754 = vshrl.u32 %v753, 5
    %v755 = vand.u32 %v753, 31
    %v756 = vsub.s32 32, %v755
    %v757 = vshrl.u32 683565275, %v756
    %v758 = vshll.u32 683565275, %v755
    %v759 = vshrl.u32 2475754826, %v756
    %v760 = vor.u32 %v758, %v759
    %v761 = vshll.u32 2475754826, %v755
    %v762 = vshrl.u32 2131351028, %v756
    %v763 = vor.u32 %v761, %v762
    %v764 = vshll.u32 2131351028, %v755
    %v765 = vshrl.u32 2102212464, %v756
    %v766 = vor.u32 %v764, %v765
    %v767 = vshll.u32 2102212464, %v755
    %v768 = vshrl.u32 920167782, %v756
    %v769 = vor.u32 %v767, %v768
    %v770 = vshll.u32 920167782, %v755
    %v771 = vshrl.u32 1326507024, %v756
    %v772 = vor.u32 %v770, %v771
    %vm773 = vcmp.lt.s32.totalorder %v754, 1
    %vm774 = vcmp.lt.s32.totalorder %v754, 2
    %vm775 = vcmp.lt.s32.totalorder %v754, 3
    %vm776 = vcmp.lt.s32.totalorder %v754, 4
    %v777 = vsel %vm773, %v757, %v760
    %v778 = vsel %vm776, %v766, 2102212464
    %v779 = vsel %vm775, %v763, %v778
    %v780 = vsel %vm774, %v777, %v779
    %v781 = vsel %vm773, %v760, %v763
    %v782 = vsel %vm776, %v769, 920167782
    %v783 = vsel %vm775, %v766, %v782
    %v784 = vsel %vm774, %v781, %v783
    %v785 = vsel %vm773, %v763, %v766
    %v786 = vsel %vm776, %v772, 1326507024
    %v787 = vsel %vm775, %v769, %v786
    %v788 = vsel %vm774, %v785, %v787
    %v789 = vshll.u32 %v749, 8
    %v790 = vand.u32 %v789, 65535
    %v791 = vshrl.u32 %v789, 16
    %v792 = vand.u32 %v788, 65535
    %v793 = vshrl.u32 %v788, 16
    %v794 = vmul.u32 %v790, %v792
    %v795 = vmul.u32 %v790, %v793
    %v796 = vmul.u32 %v791, %v792
    %v797 = vmul.u32 %v791, %v793
    %v798 = vshll.u32 %v795, 16
    %v799 = vshrl.u32 %v795, 16
    %v800 = vshll.u32 %v796, 16
    %v801 = vshrl.u32 %v796, 16
    %vm802 = vc.u32 %v794, %v798
    %v803 = vsel %vm802, 1, 0
    %v804 = vadd.s32 %v794, %v798
    %v805 = vadd.s32 %v797, %v803
    %vm806 = vc.u32 %v804, %v800
    %v807 = vsel %vm806, 1, 0
    %v808 = vadd.s32 %v804, %v800
    %v809 = vadd.s32 %v805, %v807
    %v810 = vadd.s32 %v809, %v799
    %v811 = vadd.s32 %v810, %v801
    %v812 = vand.u32 %v789, 65535
    %v813 = vshrl.u32 %v789, 16
    %v814 = vand.u32 %v784, 65535
    %v815 = vshrl.u32 %v784, 16
    %v816 = vmul.u32 %v812, %v814
    %v817 = vmul.u32 %v812, %v815
    %v818 = vmul.u32 %v813, %v814
    %v819 = vmul.u32 %v813, %v815
    %v820 = vshll.u32 %v817, 16
    %v821 = vshrl.u32 %v817, 16
    %v822 = vshll.u32 %v818, 16
    %v823 = vshrl.u32 %v818, 16
    %vm824 = vc.u32 %v816, %v820
    %v825 = vsel %vm824, 1, 0
    %v826 = vadd.s32 %v816, %v820
    %v827 = vadd.s32 %v819, %v825
    %vm828 = vc.u32 %v826, %v822
    %v829 = vsel %vm828, 1, 0
    %v830 = vadd.s32 %v826, %v822
    %v831 = vadd.s32 %v827, %v829
    %v832 = vadd.s32 %v831, %v821
    %v833 = vadd.s32 %v832, %v823
    %v834 = vmul.u32 %v789, %v780
    %v835 = vadd.s32 %v811, %v830
    %vm836 = vc.u32 %v811, %v830
    %v837 = vadd.s32 %v833, 1
    %v838 = vsel %vm836, %v837, %v833
    %v839 = vadd.s32 %v834, %v838
    %v840 = vadd.s32 %v839, 536870912
    %v841 = vshrl.u32 %v840, 30
    %v842 = vshll.u32 %v841, 30
    %v843 = vsub.s32 %v839, %v842
    %vm844 = vcmp.lt.s32.totalorder %v843, 0
    %v845 = vsub.s32 0, %v843
    %v846 = vsel %vm844, %v845, %v843
    %v847 = vclz %v846
    %v848 = vsub.s32 %v847, 2
    %vm849 = vcmp.gt.s32.totalorder 0, %v848
    %v850 = vsel %vm849, 0, %v848
    %v851 = vsub.s32 32, %v850
    %v852 = vshll.u32 %v843, %v850
    %v853 = vshrl.u32 %v835, %v851
    %v854 = vor.u32 %v852, %v853
    %v855 = vsub.s32 4294967266, %v850
    %v856 = vadd.s32 %v855, 127
    %v857 = vshll.u32 %v856, 23
    %v858 = vor.u32 4788187, %v857
    %v859 = vand.u32 2147483647, %v858
    %v861 = vcvt.s32.f32 %v854
    %v862 = vmul.f32 %v861, %v859
    %v863 = vxor.u32 %v862, 2147483648
    %v864 = vsel %vm743, %v863, %v862
    %v865 = vsub.s32 4, %v841
    %v866 = vsel %vm743, %v865, %v841
    %v867 = vsel %vm742, %v586, %v864
    %v868 = vsel %vm742, 0, %v866
    %v869 = vmul.f32 %v867, %v867
    %v870 = vmul.f32 %v869, -0.001358992
    %v871 = vadd.f32 %v870, 0.041655596
    %v872 = vmul.f32 %v869, %v871
    %v873 = vadd.f32 %v872, -0.4999988
    %v874 = vmul.f32 %v869, %v873
    %v875 = vadd.f32 1.0, %v874
    %v876 = vmul.f32 %v867, %v867
    %v877 = vmul.f32 %v876, -0.00019511016
    %v878 = vadd.f32 %v877, 0.008332121
    %v879 = vmul.f32 %v876, %v878
    %v880 = vadd.f32 %v879, -0.16666654
    %v881 = vmul.f32 %v876, %v880
    %v882 = vadd.f32 %v881, 1.0
    %v883 = vmul.f32 %v882, %v867
    %vm884 = vweird.f32 %v586
    %v885 = vand.u32 %v868, 3
    %vm886 = vcmp.lt.s32.totalorder %v885, 2
    %vm887 = vcmp.eq.s32.totalorder %v885, 0
    %v888 = vxor.u32 %v883, 2147483648
    %v889 = vsel %vm887, %v875, %v888
    %vm890 = vcmp.eq.s32.totalorder %v885, 2
    %v891 = vxor.u32 %v875, 2147483648
    %v892 = vsel %vm890, %v891, %v883
    %v893 = vsel %vm886, %v889, %v892
    %v894 = vsel %vm884, nan, %v893
    %v895 = vadd.f32 %v740, 1.0
    %v896 = vadd.f32 %v894, 1.0
    %v897 = vmul.f32 %v895, 0.5
    %v898 = vmul.f32 %v896, 0.5
    %v899 = vsel %vm583, %v897, 0.0
    %v900 = vsel %vm584, %v898, 0.0
    %902 = vset.pattern.permute.xlu0 0
    %903 = vperm.xlu0 %902, %v168
    %v904 = vpop.permute.xlu0 %903
    %907 = vset.pattern.permute.xlu0 0
    %908 = vperm.xlu0 %907, %v169
    %v909 = vpop.permute.xlu0 %908
    %v911 = vmul.f32 %v555, %v904
    %v912 = vmul.f32 %v578, %v904
    %v913 = vmul.f32 %v558, %v909
    %v914 = vmul.f32 %v581, %v909
    %v915 = vld [vmem:[%s8] sm:$0x3]
    %v917 = vperm.slane %v915, 0
    %v918 = vperm.slane %v915, 1
    %v921 = vadd.f32 %v911, %v917
    %v922 = vadd.f32 %v912, %v918
    %v923 = vadd.f32 %v913, %v917
    %v924 = vadd.f32 %v914, %v918
    %926 = vset.pattern.permute.xlu0 0
    %927 = vperm.xlu0 %926, %v899
    %v928 = vpop.permute.xlu0 %927
    %931 = vset.pattern.permute.xlu0 0
    %932 = vperm.xlu0 %931, %v900
    %v933 = vpop.permute.xlu0 %932
    %v935 = vmul.f32 %v921, %v928
    %v936 = vmul.f32 %v922, %v928
    %v937 = vmul.f32 %v923, %v933
    %v938 = vmul.f32 %v924, %v933
    %v939 = vlaneseq
    %v940 = vand.u32 %v939, 127
    %v941 = vld [vmem:[%s128] sm:$0xff]
    %v942 = vld [vmem:[%s128 + $0x8] sm:$0xff]
    %943 = vset.pattern.permute.xlu0 0
    %944 = vperm.xlu0 %943, %v941
    %v945 = vpop.permute.xlu0 %944
    %946 = vset.pattern.permute.xlu0 0
    %947 = vperm.xlu0 %946, %v942
    %v948 = vpop.permute.xlu0 %947
    %vm949 = vcmp.eq.s32.totalorder %v945, %v940
    %vm950 = vcmp.eq.s32.totalorder %v948, %v940
    %v951 = vsel %vm949, 1, 0
    %v952 = vsel %vm950, 1, 0
    %v953 = vcvt.s32.f32 %v951
    %v954 = vcvt.s32.f32 %v952
    %v955 = vpack.c.bf16 %v954, %v953
    %v956 = vld [vmem:[%s134] sm:$0x1]
    %v957 = vperm.slane %v956, 0
    %vm958 = vcmp.eq.s32.totalorder %v171, %v957
    %v959 = vsel %vm958, 1, 0
    %v960 = vcvt.s32.f32 %v959
    %v961 = vpack.c.bf16 %v960, %v960
    %v962 = vld [vmem:[#allocation3] sm:$0xff]
    %v963 = vld [vmem:[#allocation3 + $0x8] sm:$0xff]
    %v964 = vld [vmem:[#allocation3 + $0x10] sm:$0xf]
    %v968 = vunpack.c.l.b16 %v962
    %v969 = vunpack.c.h.b16 %v962
    %v970 = vunpack.c.l.b16 %v963
    %v971 = vunpack.c.h.b16 %v963
    %v972 = vunpack.c.l.b16 %v964
    %v973 = vpack.c.b16 %v968, %v968
    %v974 = vpack.c.b16 %v969, %v969
    %v975 = vpack.c.b16 %v970, %v970
    %v976 = vpack.c.b16 %v971, %v971
    %v977 = vpack.c.b16 %v972, %v972
    %vm978 = vcmask 64512
    %v980 = vsel %vm978, %v955, 0
    %vm982 = vcmask 1043456
    %v984 = vsel %vm982, %v973, 0
    %v987 = vsel %vm982, %v974, 0
    %v990 = vsel %vm982, %v975, 0
    %v993 = vsel %vm982, %v976, 0
    %v996 = vsel %vm982, %v977, 0
    %998 = vmatpush.bf16.msra.mxu0 0
    %999 = vmatpush.bf16.msra.mxu0 0
    %1000 = vmatpush.bf16.msra.mxu0 0
    %1001 = vmatpush.bf16.msra.mxu0 0
    %1002 = vmatpush.bf16.msra.mxu0 0
    %1003 = vmatpush.bf16.msra.mxu0 0
    %1004 = vmatpush.bf16.msra.mxu0 0
    %1005 = vmatpush.bf16.msra.mxu0 %v984
    %1006 = vmatmul.bf16.gmra.mxu0 %v980
    %v1007 = vpop.f32.mrf.mxu0
    %v1008 = vadd.f32 0.0, %v1007
    %v1009 = vpop.f32.mrf.mxu0
    %v1010 = vadd.f32 0.0, %v1009
    %1011 = vdwg.mxu0
    %1012 = vmatpush.bf16.msra.mxu0 0
    %1013 = vmatpush.bf16.msra.mxu0 0
    %1014 = vmatpush.bf16.msra.mxu0 0
    %1015 = vmatpush.bf16.msra.mxu0 0
    %1016 = vmatpush.bf16.msra.mxu0 0
    %1017 = vmatpush.bf16.msra.mxu0 0
    %1018 = vmatpush.bf16.msra.mxu0 0
    %1019 = vmatpush.bf16.msra.mxu0 %v987
    %1020 = vmatmul.bf16.gmra.mxu0 %v980
    %v1021 = vpop.f32.mrf.mxu0
    %v1022 = vadd.f32 0.0, %v1021
    %v1023 = vpop.f32.mrf.mxu0
    %v1024 = vadd.f32 0.0, %v1023
    %1025 = vdwg.mxu0
    %1026 = vmatpush.bf16.msra.mxu0 0
    %1027 = vmatpush.bf16.msra.mxu0 0
    %1028 = vmatpush.bf16.msra.mxu0 0
    %1029 = vmatpush.bf16.msra.mxu0 0
    %1030 = vmatpush.bf16.msra.mxu0 0
    %1031 = vmatpush.bf16.msra.mxu0 0
    %1032 = vmatpush.bf16.msra.mxu0 0
    %1033 = vmatpush.bf16.msra.mxu0 %v990
    %1034 = vmatmul.bf16.gmra.mxu0 %v980
    %v1035 = vpop.f32.mrf.mxu0
    %v1036 = vadd.f32 0.0, %v1035
    %v1037 = vpop.f32.mrf.mxu0
    %v1038 = vadd.f32 0.0, %v1037
    %1039 = vdwg.mxu0
    %1040 = vmatpush.bf16.msra.mxu0 0
    %1041 = vmatpush.bf16.msra.mxu0 0
    %1042 = vmatpush.bf16.msra.mxu0 0
    %1043 = vmatpush.bf16.msra.mxu0 0
    %1044 = vmatpush.bf16.msra.mxu0 0
    %1045 = vmatpush.bf16.msra.mxu0 0
    %1046 = vmatpush.bf16.msra.mxu0 0
    %1047 = vmatpush.bf16.msra.mxu0 %v993
    %1048 = vmatmul.bf16.gmra.mxu0 %v980
    %v1049 = vpop.f32.mrf.mxu0
    %v1050 = vadd.f32 0.0, %v1049
    %v1051 = vpop.f32.mrf.mxu0
    %v1052 = vadd.f32 0.0, %v1051
    %1053 = vdwg.mxu0
    %1054 = vmatpush.bf16.msra.mxu0 0
    %1055 = vmatpush.bf16.msra.mxu0 0
    %1056 = vmatpush.bf16.msra.mxu0 0
    %1057 = vmatpush.bf16.msra.mxu0 0
    %1058 = vmatpush.bf16.msra.mxu0 0
    %1059 = vmatpush.bf16.msra.mxu0 0
    %1060 = vmatpush.bf16.msra.mxu0 0
    %1061 = vmatpush.bf16.msra.mxu0 %v996
    %1062 = vmatmul.bf16.gmra.mxu0 %v980
    %v1063 = vpop.f32.mrf.mxu0
    %v1064 = vadd.f32 0.0, %v1063
    %v1065 = vpop.f32.mrf.mxu0
    %v1066 = vadd.f32 0.0, %v1065
    %1067 = vdwg.mxu0
    %v1068 = vmul.f32 %v935, %v1008
    %v1069 = vmul.f32 %v936, %v1022
    %v1070 = vmul.f32 %v937, %v1010
    %v1071 = vmul.f32 %v938, %v1024
    %v1072 = vld [vmem:[%s141] sm:$0xff]
    %v1073 = vld [vmem:[%s141 + $0x8] sm:$0xff]
    %v1074 = vmul.f32 %v1072, %v904
    %v1075 = vmul.f32 %v1073, %v909
    %v1076 = vmul.f32 %v1036, %v1068
    %v1077 = vmul.f32 %v1038, %v1070
    %1079 = vset.pattern.permute.xlu0 0
    %1080 = vperm.xlu0 %1079, %v1074
    %v1081 = vpop.permute.xlu0 %1080
    %1084 = vset.pattern.permute.xlu0 0
    %1085 = vperm.xlu0 %1084, %v1075
    %v1086 = vpop.permute.xlu0 %1085
    %v1088 = vmul.f32 %v1069, %v1081
    %v1089 = vmul.f32 %v1071, %v1086
    %v1090 = vadd.f32 %v1076, %v1088
    %v1091 = vadd.f32 %v1077, %v1089
    %v1092 = vmul.f32 %v1050, %v1068
    %v1093 = vmul.f32 %v1052, %v1070
    %1094 = vset.pattern.permute.xlu0 1
    %1095 = vperm.xlu0 %1094, %v1074
    %v1096 = vpop.permute.xlu0 %1095
    %1098 = vset.pattern.permute.xlu0 1
    %1099 = vperm.xlu0 %1098, %v1075
    %v1100 = vpop.permute.xlu0 %1099
    %v1102 = vmul.f32 %v1069, %v1096
    %v1103 = vmul.f32 %v1071, %v1100
    %v1104 = vadd.f32 %v1092, %v1102
    %v1105 = vadd.f32 %v1093, %v1103
    %v1106 = vmul.f32 %v1064, %v1068
    %v1107 = vmul.f32 %v1066, %v1070
    %1108 = vset.pattern.permute.xlu0 2
    %1109 = vperm.xlu0 %1108, %v1074
    %v1110 = vpop.permute.xlu0 %1109
    %1112 = vset.pattern.permute.xlu0 2
    %1113 = vperm.xlu0 %1112, %v1075
    %v1114 = vpop.permute.xlu0 %1113
    %v1116 = vmul.f32 %v1069, %v1110
    %v1117 = vmul.f32 %v1071, %v1114
    %v1118 = vadd.f32 %v1106, %v1116
    %v1119 = vadd.f32 %v1107, %v1117
    %v1120 = vpack.c.bf16 %v1071, %v1069
    %v1121 = vpack.c.bf16 %v1091, %v1090
    %v1122 = vpack.c.bf16 %v1105, %v1104
    %v1123 = vpack.c.bf16 %v1119, %v1118
    %v1124 = vld [vmem:[#allocation2] sm:$0xff]
    %v1125 = vld [vmem:[#allocation2 + $0x8] sm:$0xff]
    %v1126 = vld [vmem:[#allocation2 + $0x10] sm:$0xff]
    %v1127 = vld [vmem:[#allocation2 + $0x18] sm:$0xff]
    %v1129 = vsel %vm530, %v961, 0
    %1131 = vmatpush.bf16.msra.mxu0 0
    %1132 = vmatpush.bf16.msra.mxu0 0
    %1133 = vmatpush.bf16.msra.mxu0 0
    %1134 = vmatpush.bf16.msra.mxu0 0
    %1135 = vmatpush.bf16.msra.mxu0 0
    %1136 = vmatpush.bf16.msra.mxu0 0
    %1137 = vmatpush.bf16.msra.mxu0 0
    %1138 = vmatpush.bf16.msra.mxu0 %v1120
    %1139 = vmatmul.bf16.gmra.mxu0 %v1129
    %v1140 = vpop.f32.mrf.mxu0
    %v1141 = vadd.f32 0.0, %v1140
    %v1142 = vpop.f32.mrf.mxu0
    %1143 = vdwg.mxu0
    %1144 = vmatpush.bf16.msra.mxu0 0
    %1145 = vmatpush.bf16.msra.mxu0 0
    %1146 = vmatpush.bf16.msra.mxu0 0
    %1147 = vmatpush.bf16.msra.mxu0 0
    %1148 = vmatpush.bf16.msra.mxu0 0
    %1149 = vmatpush.bf16.msra.mxu0 0
    %1150 = vmatpush.bf16.msra.mxu0 0
    %1151 = vmatpush.bf16.msra.mxu0 %v1121
    %1152 = vmatmul.bf16.gmra.mxu0 %v1129
    %v1153 = vpop.f32.mrf.mxu0
    %v1154 = vadd.f32 0.0, %v1153
    %v1155 = vpop.f32.mrf.mxu0
    %1156 = vdwg.mxu0
    %1157 = vmatpush.bf16.msra.mxu0 0
    %1158 = vmatpush.bf16.msra.mxu0 0
    %1159 = vmatpush.bf16.msra.mxu0 0
    %1160 = vmatpush.bf16.msra.mxu0 0
    %1161 = vmatpush.bf16.msra.mxu0 0
    %1162 = vmatpush.bf16.msra.mxu0 0
    %1163 = vmatpush.bf16.msra.mxu0 0
    %1164 = vmatpush.bf16.msra.mxu0 %v1122
    %1165 = vmatmul.bf16.gmra.mxu0 %v1129
    %v1166 = vpop.f32.mrf.mxu0
    %v1167 = vadd.f32 0.0, %v1166
    %v1168 = vpop.f32.mrf.mxu0
    %1169 = vdwg.mxu0
    %1170 = vmatpush.bf16.msra.mxu0 0
    %1171 = vmatpush.bf16.msra.mxu0 0
    %1172 = vmatpush.bf16.msra.mxu0 0
    %1173 = vmatpush.bf16.msra.mxu0 0
    %1174 = vmatpush.bf16.msra.mxu0 0
    %1175 = vmatpush.bf16.msra.mxu0 0
    %1176 = vmatpush.bf16.msra.mxu0 0
    %1177 = vmatpush.bf16.msra.mxu0 %v1123
    %1178 = vmatmul.bf16.gmra.mxu0 %v1129
    %v1179 = vpop.f32.mrf.mxu0
    %v1180 = vadd.f32 0.0, %v1179
    %v1181 = vpop.f32.mrf.mxu0
    %1182 = vdwg.mxu0
    %v1183 = vadd.f32 %v1124, %v1141
    %v1184 = vadd.f32 %v1125, %v1154
    %v1185 = vadd.f32 %v1126, %v1167
    %v1186 = vadd.f32 %v1127, %v1180
    %1187 = vst [vmem:[#allocation2] sm:$0xff] %v1183
    %1188 = vst [vmem:[#allocation2 + $0x8] sm:$0xff] %v1184
    %1189 = vst [vmem:[#allocation2 + $0x10] sm:$0xff] %v1185
    %1190 = vst [vmem:[#allocation2 + $0x18] sm:$0xff] %v1186
    %p1191 = scmp.eq.s32.totalorder 0, 0
    %p1192 = pnand %p158, %p1191
    %p1193 = pneg %p1192
    // Predicated region
    $region50: #{tpu_custom_call.1} parent=1 // pred_check
      _
    $region51: #{tpu_custom_call.1} parent=1 // pred_check_branch
      %1195 = sbr.rel (%p1192) target = $region53
    $region52: #{tpu_custom_call.1} parent=1 // pred_region
      %v1196 = vld [vmem:[%s0] sm:$0xff]
      %v1197 = vld [vmem:[%s0 + $0x8] sm:$0xff]
      %v1198 = vld [vmem:[%s0 + $0x10] sm:$0xff]
      %v1199 = vld [vmem:[%s0 + $0x18] sm:$0xff]
      %v1200 = vld [vmem:[#allocation2] sm:$0xff]
      %v1201 = vld [vmem:[#allocation2 + $0x8] sm:$0xff]
      %v1202 = vld [vmem:[#allocation2 + $0x10] sm:$0xff]
      %v1203 = vld [vmem:[#allocation2 + $0x18] sm:$0xff]
      %v1204 = vadd.f32 %v1196, %v1200
      %v1205 = vadd.f32 %v1197, %v1201
      %v1206 = vadd.f32 %v1198, %v1202
      %v1207 = vadd.f32 %v1199, %v1203
      %1208 = vst [vmem:[#allocation8] sm:$0xff] %v1204
      %1209 = vst [vmem:[#allocation8 + $0x8] sm:$0xff] %v1205
      %1210 = vst [vmem:[#allocation8 + $0x10] sm:$0xff] %v1206
      %1211 = vst [vmem:[#allocation8 + $0x18] sm:$0xff] %v1207
    $region53: #{tpu_custom_call.1} parent=1 // pred_fallthru
      _
    %p1212 = scmp.gt.s32.totalorder 0, 0
    %p1213 = pnand %p158, %p1212
    %p1214 = pneg %p1213
    // Predicated region
    $region54: #{tpu_custom_call.1} parent=1 // pred_check
      _
    $region55: #{tpu_custom_call.1} parent=1 // pred_check_branch
      %1216 = sbr.rel (%p1213) target = $region57
    $region56: #{tpu_custom_call.1} parent=1 // pred_region
      %v1217 = vld [vmem:[#allocation2] sm:$0xff]
      %v1218 = vld [vmem:[#allocation2 + $0x8] sm:$0xff]
      %v1219 = vld [vmem:[#allocation2 + $0x10] sm:$0xff]
      %v1220 = vld [vmem:[#allocation2 + $0x18] sm:$0xff]
      %1221 = vst [vmem:[#allocation8] sm:$0xff] %v1217
      %1222 = vst [vmem:[#allocation8 + $0x8] sm:$0xff] %v1218
      %1223 = vst [vmem:[#allocation8 + $0x10] sm:$0xff] %v1219
      %1224 = vst [vmem:[#allocation8 + $0x18] sm:$0xff] %v1220
    $region57: #{tpu_custom_call.1} parent=1 // pred_fallthru
      _
    // Predicated region
    $region58: #{tpu_custom_call.1} parent=1 // pred_check
      _
    $region59: #{tpu_custom_call.1} parent=1 // pred_check_branch
      %1226 = sbr.rel (0) target = $region61
    $region60: #{tpu_custom_call.1} parent=1 // pred_region
      %1228 = vsyncadd [#allocation5], 0
      %s1230 = sshll.u32 [#allocation8], 4
      %s1231 = int_to_ptr.vmem [resolvable:$true] %s1230
      %s1232 = sshll.u32 %s9, 4
      %s1233 = int_to_ptr.hbm [resolvable:$true] %s1232
      %1235 = dma.vmem_to_hbm [thread:$0]  %s1231, 512, %s1233, [#allocation5]
    $region61: #{tpu_custom_call.1} parent=1 // pred_fallthru
      _
    // Predicated region
    $region62: #{tpu_custom_call.1} parent=1 // pred_check
      _
    $region63: #{tpu_custom_call.1} parent=1 // pred_check_branch
      %1237 = sbr.rel (0) target = $region65
    $region64: #{tpu_custom_call.1} parent=1 // pred_region
      %1239 = dma.done [#allocation5], 512
    $region65: #{tpu_custom_call.1} parent=1 // pred_fallthru
      _
    %1240 = vsyncpa [#allocation4], 1
    %1241 = vsyncpa [#allocation7], 1
    %1242 = vsyncpa [#allocation5], 1

// kernel: tpu_custom_call.1
$region0: #{tpu_custom_call.1}
  #allocation0 [shape = 'u32[]', space=smem, size = 0x4, offset = 0x4, fixed_abs, tag = 'smem constant byte address 0x4 - core index']
  #allocation1 [shape = 'u32[72,128]{1,0:T(1,128)}', space=vmem, size = 0x9000, scoped, tag = 'internal scratch']
  #allocation2 [shape = 'f32[8,512]{1,0:T(8,128)}', space=vmem, size = 0x4000, scoped, tag = 'scratch operand']
  %s0 = inlined_call_operand.vmem [shape: f32[8,512], index: 0, kind: input, shape index: {}]
  %s1 = inlined_call_operand.hbm [shape: bf16[8,640], index: 1, kind: input, shape index: {}]
  %s2 = inlined_call_operand.vmem [shape: s32[16,1], index: 2, kind: input, shape index: {}]
  %s3 = inlined_call_operand.vmem [shape: s32[1,16], index: 3, kind: input, shape index: {}]
  %s4 = inlined_call_operand.vmem [shape: f32[16,3], index: 4, kind: input, shape index: {}]
  %s5 = inlined_call_operand.vmem [shape: f32[16,1], index: 5, kind: input, shape index: {}]
  %s6 = inlined_call_operand.vmem [shape: f32[1,16], index: 6, kind: input, shape index: {}]
  %s7 = inlined_call_operand.hbm [shape: f32[16,256], index: 7, kind: input, shape index: {}]
  %s8 = inlined_call_operand.vmem [shape: f32[1,256], index: 8, kind: input, shape index: {}]
  %s9 = inlined_call_operand.hbm [shape: f32[1,8,512], index: 9, kind: output, shape index: {}]
  %s10 = sld [smem:[#allocation0]]
  $region66: #{tpu_custom_call.1} parent=0
    _
  %s12 = ssub.s32 1, %s10
  %s13 = scalar_select 0, %s12, %s10
  $region1: #{tpu_custom_call.1} parent=0
    #allocation3 [shape = 'u8[10240]{0}', space=vmem, size = 0x2800, scoped, tag = 'input window, operand 1, single buffered']
    #allocation4 [shape = 's32[1]{0}', space=sflag, size = 0x4, scoped, tag = 'scoped memory for tpu_custom_call.1']
    #allocation5 [shape = 's32[1]{0}', space=sflag, size = 0x4, scoped, tag = 'scoped memory for tpu_custom_call.1']
    #allocation6 [shape = 'u8[16384]{0}', space=vmem, size = 0x4000, scoped, tag = 'input window, operand 7, single buffered']
    #allocation7 [shape = 's32[1]{0}', space=sflag, size = 0x4, scoped, tag = 'scoped memory for tpu_custom_call.1']
    #allocation8 [shape = 'u8[16384]{0}', space=vmem, size = 0x4000, scoped, tag = 'output window, operand 0, single buffered']
    %14 = vsyncpa [#allocation4], 0
    %15 = vsyncpa [#allocation7], 0
    %16 = vsyncpa [#allocation5], 0
    // Predicated region
    $region2: #{tpu_custom_call.1} parent=1 // pred_check
      _
    $region3: #{tpu_custom_call.1} parent=1 // pred_check_branch
      %18 = sbr.rel (0) target = $region5
    $region4: #{tpu_custom_call.1} parent=1 // pred_region
      _
    $region5: #{tpu_custom_call.1} parent=1 // pred_fallthru
      _
    // Predicated region
    $region6: #{tpu_custom_call.1} parent=1 // pred_check
      _
    $region7: #{tpu_custom_call.1} parent=1 // pred_check_branch
      %20 = sbr.rel (0) target = $region9
    $region8: #{tpu_custom_call.1} parent=1 // pred_region
      %22 = vsyncadd [#allocation4], 0
      %s24 = sshll.u32 %s1, 4
      %s25 = int_to_ptr.hbm [resolvable:$true] %s24
      %s26 = sshll.u32 [#allocation3], 4
      %s27 = int_to_ptr.vmem [resolvable:$true] %s26
      %29 = dma.hbm_to_vmem [thread:$0]  %s25, 320, %s27, [#allocation4]
    $region9: #{tpu_custom_call.1} parent=1 // pred_fallthru
      _
    // Predicated region
    $region10: #{tpu_custom_call.1} parent=1 // pred_check
      _
    $region11: #{tpu_custom_call.1} parent=1 // pred_check_branch
      %31 = sbr.rel (0) target = $region13
    $region12: #{tpu_custom_call.1} parent=1 // pred_region
      %s32 = sadd.s32 0, 0
      %s33 = smul.u32 2, %s32
      %p34 = scmp.lt.s32.totalorder %s33, 1
      %s35 = scalar_select %p34, %s33, 1
      %s36 = smul.addr %s35, 8
      %s37 = scalar_lea.vmem %s2, %s36
      %s38 = sadd.s32 0, 0
      %s39 = smul.u32 2, %s38
    $region13: #{tpu_custom_call.1} parent=1 // pred_fallthru
      _
    // Predicated region
    $region14: #{tpu_custom_call.1} parent=1 // pred_check
      _
    $region15: #{tpu_custom_call.1} parent=1 // pred_check_branch
      %41 = sbr.rel (0) target = $region17
    $region16: #{tpu_custom_call.1} parent=1 // pred_region
      %s42 = sadd.s32 0, 0
      %p43 = scmp.lt.s32.totalorder %s42, 0
      %s44 = scalar_select %p43, %s42, 0
      %s45 = scalar_lea.vmem %s3, %s44
      %s46 = sadd.s32 0, 0
    $region17: #{tpu_custom_call.1} parent=1 // pred_fallthru
      _
    // Predicated region
    $region18: #{tpu_custom_call.1} parent=1 // pred_check
      _
    $region19: #{tpu_custom_call.1} parent=1 // pred_check_branch
      %48 = sbr.rel (0) target = $region21
    $region20: #{tpu_custom_call.1} parent=1 // pred_region
      %s49 = sadd.s32 0, 0
      %s50 = smul.u32 2, %s49
      %p51 = scmp.lt.s32.totalorder %s50, 1
      %s52 = scalar_select %p51, %s50, 1
      %s53 = smul.addr %s52, 8
      %s54 = scalar_lea.vmem %s4, %s53
      %s55 = sadd.s32 0, 0
      %s56 = smul.u32 2, %s55
    $region21: #{tpu_custom_call.1} parent=1 // pred_fallthru
      _
    // Predicated region
    $region22: #{tpu_custom_call.1} parent=1 // pred_check
      _
    $region23: #{tpu_custom_call.1} parent=1 // pred_check_branch
      %58 = sbr.rel (0) target = $region25
    $region24: #{tpu_custom_call.1} parent=1 // pred_region
      %s59 = sadd.s32 0, 0
      %s60 = smul.u32 2, %s59
      %p61 = scmp.lt.s32.totalorder %s60, 1
      %s62 = scalar_select %p61, %s60, 1
      %s63 = smul.addr %s62, 8
      %s64 = scalar_lea.vmem %s5, %s63
      %s65 = sadd.s32 0, 0
      %s66 = smul.u32 2, %s65
    $region25: #{tpu_custom_call.1} parent=1 // pred_fallthru
      _
    // Predicated region
    $region26: #{tpu_custom_call.1} parent=1 // pred_check
      _
    $region27: #{tpu_custom_call.1} parent=1 // pred_check_branch
      %68 = sbr.rel (0) target = $region29
    $region28: #{tpu_custom_call.1} parent=1 // pred_region
      %s69 = sadd.s32 0, 0
      %p70 = scmp.lt.s32.totalorder %s69, 0
      %s71 = scalar_select %p70, %s69, 0
      %s72 = scalar_lea.vmem %s6, %s71
      %s73 = sadd.s32 0, 0
    $region29: #{tpu_custom_call.1} parent=1 // pred_fallthru
      _
    // Predicated region
    $region30: #{tpu_custom_call.1} parent=1 // pred_check
      _
    $region31: #{tpu_custom_call.1} parent=1 // pred_check_branch
      %75 = sbr.rel (0) target = $region33
    $region32: #{tpu_custom_call.1} parent=1 // pred_region
      %77 = vsyncadd [#allocation7], 0
      %s78 = sshll.u32 %s7, 4
      %s79 = int_to_ptr.hbm [resolvable:$true] %s78
      %s80 = sshll.u32 [#allocation6], 4
      %s81 = int_to_ptr.vmem [resolvable:$true] %s80
      %86 = dma.hbm_to_vmem [thread:$0]  %s79, 512, %s81, [#allocation7], 256, 256, 16
    $region33: #{tpu_custom_call.1} parent=1 // pred_fallthru
      _
    // Predicated region
    $region34: #{tpu_custom_call.1} parent=1 // pred_check
      _
    $region35: #{tpu_custom_call.1} parent=1 // pred_check_branch
      %88 = sbr.rel (0) target = $region37
    $region36: #{tpu_custom_call.1} parent=1 // pred_region
      _
    $region37: #{tpu_custom_call.1} parent=1 // pred_fallthru
      _
    // Predicated region
    $region38: #{tpu_custom_call.1} parent=1 // pred_check
      _
    $region39: #{tpu_custom_call.1} parent=1 // pred_check_branch
      %90 = sbr.rel (0) target = $region41
    $region40: #{tpu_custom_call.1} parent=1 // pred_region
      %92 = dma.done [#allocation4], 320
    $region41: #{tpu_custom_call.1} parent=1 // pred_fallthru
      _
    // Predicated region
    $region42: #{tpu_custom_call.1} parent=1 // pred_check
      _
    $region43: #{tpu_custom_call.1} parent=1 // pred_check_branch
      %94 = sbr.rel (0) target = $region45
    $region44: #{tpu_custom_call.1} parent=1 // pred_region
      %96 = dma.done [#allocation7], 512
    $region45: #{tpu_custom_call.1} parent=1 // pred_fallthru
      _
    %s97 = sadd.s32 0, 0
    %s98 = smul.u32 2, %s97
    %p99 = scmp.lt.s32.totalorder %s98, 1
    %s100 = scalar_select %p99, %s98, 1
    %s101 = smul.addr %s100, 8
    %s102 = scalar_lea.vmem %s2, %s101
    %s103 = sadd.s32 0, 0
    %p104 = scmp.lt.s32.totalorder %s103, 0
    %s105 = scalar_select %p104, %s103, 0
    %s106 = scalar_lea.vmem %s3, %s105
    %s107 = sadd.s32 0, 0
    %s108 = smul.u32 2, %s107
    %p109 = scmp.lt.s32.totalorder %s108, 1
    %s110 = scalar_select %p109, %s108, 1
    %s111 = smul.addr %s110, 8
    %s112 = scalar_lea.vmem %s4, %s111
    %s113 = sadd.s32 0, 0
    %s114 = smul.u32 2, %s113
    %p115 = scmp.lt.s32.totalorder %s114, 1
    %s116 = scalar_select %p115, %s114, 1
    %s117 = smul.addr %s116, 8
    %s118 = scalar_lea.vmem %s5, %s117
    %s119 = sadd.s32 0, 0
    %p120 = scmp.lt.s32.totalorder %s119, 0
    %s121 = scalar_select %p120, %s119, 0
    %s122 = scalar_lea.vmem %s6, %s121
    %s123 = sadd.s32 0, 0
    %s124 = smul.u32 2, %s123
    %p125 = scmp.lt.s32.totalorder %s124, 1
    %s126 = scalar_select %p125, %s124, 1
    %s127 = smul.addr %s126, 8
    %s128 = scalar_lea.vmem %s2, %s127
    %s129 = sadd.s32 0, 0
    %s130 = smul.u32 2, %s129
    %s131 = sadd.s32 0, 0
    %p132 = scmp.lt.s32.totalorder %s131, 0
    %s133 = scalar_select %p132, %s131, 0
    %s134 = scalar_lea.vmem %s3, %s133
    %s135 = sadd.s32 0, 0
    %s136 = sadd.s32 0, 0
    %s137 = smul.u32 2, %s136
    %p138 = scmp.lt.s32.totalorder %s137, 1
    %s139 = scalar_select %p138, %s137, 1
    %s140 = smul.addr %s139, 8
    %s141 = scalar_lea.vmem %s4, %s140
    %s142 = sadd.s32 0, 0
    %s143 = smul.u32 2, %s142
    %s144 = sadd.s32 0, 0
    %s145 = smul.u32 2, %s144
    %p146 = scmp.lt.s32.totalorder %s145, 1
    %s147 = scalar_select %p146, %s145, 1
    %s148 = smul.addr %s147, 8
    %s149 = scalar_lea.vmem %s5, %s148
    %s150 = sadd.s32 0, 0
    %s151 = smul.u32 2, %s150
    %s152 = sadd.s32 0, 0
    %p153 = scmp.lt.s32.totalorder %s152, 0
    %s154 = scalar_select %p153, %s152, 0
    %s155 = scalar_lea.vmem %s6, %s154
    %s156 = sadd.s32 0, 0
    %p158 = scmp.eq.s32.totalorder 0, 0
    // Predicated region
    $region46: #{tpu_custom_call.1} parent=1 // pred_check
      %p159 = pneg %p158
    $region47: #{tpu_custom_call.1} parent=1 // pred_check_branch
      %161 = sbr.rel (%p159) target = $region49
    $region48: #{tpu_custom_call.1} parent=1 // pred_region
      %162 = vst [vmem:[#allocation2] sm:$0xff] 0.0
      %163 = vst [vmem:[#allocation2 + $0x8] sm:$0xff] 0.0
      %164 = vst [vmem:[#allocation2 + $0x10] sm:$0xff] 0.0
      %165 = vst [vmem:[#allocation2 + $0x18] sm:$0xff] 0.0
    $region49: #{tpu_custom_call.1} parent=1 // pred_fallthru
      _
    %v166 = vld [vmem:[%s149] sm:$0xff]
    %v167 = vld [vmem:[%s149 + $0x8] sm:$0xff]
    %v168 = vrcp.pop %v166
    %v169 = vrcp.pop %v167
    %v170 = vlaneseq
    %v171 = vshrl.u32 %v170, 7
    %v172 = vadd.s32 %v171, 8
    %v173 = vadd.s32 %v171, 1
    %v174 = vadd.s32 %v172, 1
    %v175 = vcvt.s32.f32 %v173
    %v176 = vcvt.s32.f32 %v174
    %v177 = vld [vmem:[%s155] sm:$0x1]
    %v178 = vmul.f32 %v177, 0.62831855
    %v180 = vperm.slane %v178, 0
    %v182 = vmul.f32 %v180, %v175
    %v183 = vmul.f32 %v180, %v176
    %v184 = vand.u32 2147483647, %v182
    %vm185 = vcmp.le.f32.partialorder %v184, 0.7853982
    %vm186 = vcmp.lt.s32.totalorder %v182, 0
    %v187 = vand.u32 %v182, 2139095040
    %v188 = vshrl.u32 %v187, 23
    %v189 = vsub.s32 %v188, 127
    %v190 = vand.u32 2147483647, %v182
    %v191 = vand.u32 %v190, 8388607
    %v192 = vor.u32 %v191, 8388608
    %v193 = vsub.s32 0, %v192
    %v194 = vadd.s32 %v189, 1
    %vm195 = vcmp.gt.s32.totalorder %v194, 0
    %v196 = vsel %vm195, %v194, 0
    %v197 = vshrl.u32 %v196, 5
    %v198 = vand.u32 %v196, 31
    %v199 = vsub.s32 32, %v198
    %v200 = vshrl.u32 683565275, %v199
    %v201 = vshll.u32 683565275, %v198
    %v202 = vshrl.u32 2475754826, %v199
    %v203 = vor.u32 %v201, %v202
    %v204 = vshll.u32 2475754826, %v198
    %v205 = vshrl.u32 2131351028, %v199
    %v206 = vor.u32 %v204, %v205
    %v207 = vshll.u32 2131351028, %v198
    %v208 = vshrl.u32 2102212464, %v199
    %v209 = vor.u32 %v207, %v208
    %v210 = vshll.u32 2102212464, %v198
    %v211 = vshrl.u32 920167782, %v199
    %v212 = vor.u32 %v210, %v211
    %v213 = vshll.u32 920167782, %v198
    %v214 = vshrl.u32 1326507024, %v199
    %v215 = vor.u32 %v213, %v214
    %vm216 = vcmp.lt.s32.totalorder %v197, 1
    %vm217 = vcmp.lt.s32.totalorder %v197, 2
    %vm218 = vcmp.lt.s32.totalorder %v197, 3
    %vm219 = vcmp.lt.s32.totalorder %v197, 4
    %v220 = vsel %vm216, %v200, %v203
    %v221 = vsel %vm219, %v209, 2102212464
    %v222 = vsel %vm218, %v206, %v221
    %v223 = vsel %vm217, %v220, %v222
    %v224 = vsel %vm216, %v203, %v206
    %v225 = vsel %vm219, %v212, 920167782
    %v226 = vsel %vm218, %v209, %v225
    %v227 = vsel %vm217, %v224, %v226
    %v228 = vsel %vm216, %v206, %v209
    %v229 = vsel %vm219, %v215, 1326507024
    %v230 = vsel %vm218, %v212, %v229
    %v231 = vsel %vm217, %v228, %v230
    %v232 = vshll.u32 %v192, 8
    %v233 = vand.u32 %v232, 65535
    %v234 = vshrl.u32 %v232, 16
    %v235 = vand.u32 %v231, 65535
    %v236 = vshrl.u32 %v231, 16
    %v237 = vmul.u32 %v233, %v235
    %v238 = vmul.u32 %v233, %v236
    %v239 = vmul.u32 %v234, %v235
    %v240 = vmul.u32 %v234, %v236
    %v241 = vshll.u32 %v238, 16
    %v242 = vshrl.u32 %v238, 16
    %v243 = vshll.u32 %v239, 16
    %v244 = vshrl.u32 %v239, 16
    %vm245 = vc.u32 %v237, %v241
    %v246 = vsel %vm245, 1, 0
    %v247 = vadd.s32 %v237, %v241
    %v248 = vadd.s32 %v240, %v246
    %vm249 = vc.u32 %v247, %v243
    %v250 = vsel %vm249, 1, 0
    %v251 = vadd.s32 %v247, %v243
    %v252 = vadd.s32 %v248, %v250
    %v253 = vadd.s32 %v252, %v242
    %v254 = vadd.s32 %v253, %v244
    %v255 = vand.u32 %v232, 65535
    %v256 = vshrl.u32 %v232, 16
    %v257 = vand.u32 %v227, 65535
    %v258 = vshrl.u32 %v227, 16
    %v259 = vmul.u32 %v255, %v257
    %v260 = vmul.u32 %v255, %v258
    %v261 = vmul.u32 %v256, %v257
    %v262 = vmul.u32 %v256, %v258
    %v263 = vshll.u32 %v260, 16
    %v264 = vshrl.u32 %v260, 16
    %v265 = vshll.u32 %v261, 16
    %v266 = vshrl.u32 %v261, 16
    %vm267 = vc.u32 %v259, %v263
    %v268 = vsel %vm267, 1, 0
    %v269 = vadd.s32 %v259, %v263
    %v270 = vadd.s32 %v262, %v268
    %vm271 = vc.u32 %v269, %v265
    %v272 = vsel %vm271, 1, 0
    %v273 = vadd.s32 %v269, %v265
    %v274 = vadd.s32 %v270, %v272
    %v275 = vadd.s32 %v274, %v264
    %v276 = vadd.s32 %v275, %v266
    %v277 = vmul.u32 %v232, %v223
    %v278 = vadd.s32 %v254, %v273
    %vm279 = vc.u32 %v254, %v273
    %v280 = vadd.s32 %v276, 1
    %v281 = vsel %vm279, %v280, %v276
    %v282 = vadd.s32 %v277, %v281
    %v283 = vadd.s32 %v282, 536870912
    %v284 = vshrl.u32 %v283, 30
    %v285 = vshll.u32 %v284, 30
    %v286 = vsub.s32 %v282, %v285
    %vm287 = vcmp.lt.s32.totalorder %v286, 0
    %v288 = vsub.s32 0, %v286
    %v289 = vsel %vm287, %v288, %v286
    %v290 = vclz %v289
    %v291 = vsub.s32 %v290, 2
    %vm292 = vcmp.gt.s32.totalorder 0, %v291
    %v293 = vsel %vm292, 0, %v291
    %v294 = vsub.s32 32, %v293
    %v295 = vshll.u32 %v286, %v293
    %v296 = vshrl.u32 %v278, %v294
    %v297 = vor.u32 %v295, %v296
    %v298 = vsub.s32 4294967266, %v293
    %v299 = vadd.s32 %v298, 127
    %v300 = vshll.u32 %v299, 23
    %v301 = vor.u32 4788187, %v300
    %v302 = vand.u32 2147483647, %v301
    %v304 = vcvt.s32.f32 %v297
    %v305 = vmul.f32 %v304, %v302
    %v306 = vxor.u32 %v305, 2147483648
    %v307 = vsel %vm186, %v306, %v305
    %v308 = vsub.s32 4, %v284
    %v309 = vsel %vm186, %v308, %v284
    %v310 = vsel %vm185, %v182, %v307
    %v311 = vsel %vm185, 0, %v309
    %v312 = vmul.f32 %v310, %v310
    %v313 = vmul.f32 %v312, -0.001358992
    %v314 = vadd.f32 %v313, 0.041655596
    %v315 = vmul.f32 %v312, %v314
    %v316 = vadd.f32 %v315, -0.4999988
    %v317 = vmul.f32 %v312, %v316
    %v318 = vadd.f32 1.0, %v317
    %v319 = vmul.f32 %v310, %v310
    %v320 = vmul.f32 %v319, -0.00019511016
    %v321 = vadd.f32 %v320, 0.008332121
    %v322 = vmul.f32 %v319, %v321
    %v323 = vadd.f32 %v322, -0.16666654
    %v324 = vmul.f32 %v319, %v323
    %v325 = vadd.f32 %v324, 1.0
    %v326 = vmul.f32 %v325, %v310
    %vm327 = vweird.f32 %v182
    %v328 = vadd.s32 %v311, 3
    %v329 = vand.u32 %v328, 3
    %vm330 = vcmp.lt.s32.totalorder %v329, 2
    %vm331 = vcmp.eq.s32.totalorder %v329, 0
    %v332 = vxor.u32 %v326, 2147483648
    %v333 = vsel %vm331, %v318, %v332
    %vm334 = vcmp.eq.s32.totalorder %v329, 2
    %v335 = vxor.u32 %v318, 2147483648
    %v336 = vsel %vm334, %v335, %v326
    %v337 = vsel %vm330, %v333, %v336
    %v338 = vsel %vm327, nan, %v337
    %v339 = vand.u32 2147483647, %v183
    %vm340 = vcmp.le.f32.partialorder %v339, 0.7853982
    %vm341 = vcmp.lt.s32.totalorder %v183, 0
    %v342 = vand.u32 %v183, 2139095040
    %v343 = vshrl.u32 %v342, 23
    %v344 = vsub.s32 %v343, 127
    %v345 = vand.u32 2147483647, %v183
    %v346 = vand.u32 %v345, 8388607
    %v347 = vor.u32 %v346, 8388608
    %v348 = vsub.s32 0, %v347
    %v349 = vadd.s32 %v344, 1
    %vm350 = vcmp.gt.s32.totalorder %v349, 0
    %v351 = vsel %vm350, %v349, 0
    %v352 = vshrl.u32 %v351, 5
    %v353 = vand.u32 %v351, 31
    %v354 = vsub.s32 32, %v353
    %v355 = vshrl.u32 683565275, %v354
    %v356 = vshll.u32 683565275, %v353
    %v357 = vshrl.u32 2475754826, %v354
    %v358 = vor.u32 %v356, %v357
    %v359 = vshll.u32 2475754826, %v353
    %v360 = vshrl.u32 2131351028, %v354
    %v361 = vor.u32 %v359, %v360
    %v362 = vshll.u32 2131351028, %v353
    %v363 = vshrl.u32 2102212464, %v354
    %v364 = vor.u32 %v362, %v363
    %v365 = vshll.u32 2102212464, %v353
    %v366 = vshrl.u32 920167782, %v354
    %v367 = vor.u32 %v365, %v366
    %v368 = vshll.u32 920167782, %v353
    %v369 = vshrl.u32 1326507024, %v354
    %v370 = vor.u32 %v368, %v369
    %vm371 = vcmp.lt.s32.totalorder %v352, 1
    %vm372 = vcmp.lt.s32.totalorder %v352, 2
    %vm373 = vcmp.lt.s32.totalorder %v352, 3
    %vm374 = vcmp.lt.s32.totalorder %v352, 4
    %v375 = vsel %vm371, %v355, %v358
    %v376 = vsel %vm374, %v364, 2102212464
    %v377 = vsel %vm373, %v361, %v376
    %v378 = vsel %vm372, %v375, %v377
    %v379 = vsel %vm371, %v358, %v361
    %v380 = vsel %vm374, %v367, 920167782
    %v381 = vsel %vm373, %v364, %v380
    %v382 = vsel %vm372, %v379, %v381
    %v383 = vsel %vm371, %v361, %v364
    %v384 = vsel %vm374, %v370, 1326507024
    %v385 = vsel %vm373, %v367, %v384
    %v386 = vsel %vm372, %v383, %v385
    %v387 = vshll.u32 %v347, 8
    %v388 = vand.u32 %v387, 65535
    %v389 = vshrl.u32 %v387, 16
    %v390 = vand.u32 %v386, 65535
    %v391 = vshrl.u32 %v386, 16
    %v392 = vmul.u32 %v388, %v390
    %v393 = vmul.u32 %v388, %v391
    %v394 = vmul.u32 %v389, %v390
    %v395 = vmul.u32 %v389, %v391
    %v396 = vshll.u32 %v393, 16
    %v397 = vshrl.u32 %v393, 16
    %v398 = vshll.u32 %v394, 16
    %v399 = vshrl.u32 %v394, 16
    %vm400 = vc.u32 %v392, %v396
    %v401 = vsel %vm400, 1, 0
    %v402 = vadd.s32 %v392, %v396
    %v403 = vadd.s32 %v395, %v401
    %vm404 = vc.u32 %v402, %v398
    %v405 = vsel %vm404, 1, 0
    %v406 = vadd.s32 %v402, %v398
    %v407 = vadd.s32 %v403, %v405
    %v408 = vadd.s32 %v407, %v397
    %v409 = vadd.s32 %v408, %v399
    %v410 = vand.u32 %v387, 65535
    %v411 = vshrl.u32 %v387, 16
    %v412 = vand.u32 %v382, 65535
    %v413 = vshrl.u32 %v382, 16
    %v414 = vmul.u32 %v410, %v412
    %v415 = vmul.u32 %v410, %v413
    %v416 = vmul.u32 %v411, %v412
    %v417 = vmul.u32 %v411, %v413
    %v418 = vshll.u32 %v415, 16
    %v419 = vshrl.u32 %v415, 16
    %v420 = vshll.u32 %v416, 16
    %v421 = vshrl.u32 %v416, 16
    %vm422 = vc.u32 %v414, %v418
    %v423 = vsel %vm422, 1, 0
    %v424 = vadd.s32 %v414, %v418
    %v425 = vadd.s32 %v417, %v423
    %vm426 = vc.u32 %v424, %v420
    %v427 = vsel %vm426, 1, 0
    %v428 = vadd.s32 %v424, %v420
    %v429 = vadd.s32 %v425, %v427
    %v430 = vadd.s32 %v429, %v419
    %v431 = vadd.s32 %v430, %v421
    %v432 = vmul.u32 %v387, %v378
    %v433 = vadd.s32 %v409, %v428
    %vm434 = vc.u32 %v409, %v428
    %v435 = vadd.s32 %v431, 1
    %v436 = vsel %vm434, %v435, %v431
    %v437 = vadd.s32 %v432, %v436
    %v438 = vadd.s32 %v437, 536870912
    %v439 = vshrl.u32 %v438, 30
    %v440 = vshll.u32 %v439, 30
    %v441 = vsub.s32 %v437, %v440
    %vm442 = vcmp.lt.s32.totalorder %v441, 0
    %v443 = vsub.s32 0, %v441
    %v444 = vsel %vm442, %v443, %v441
    %v445 = vclz %v444
    %v446 = vsub.s32 %v445, 2
    %vm447 = vcmp.gt.s32.totalorder 0, %v446
    %v448 = vsel %vm447, 0, %v446
    %v449 = vsub.s32 32, %v448
    %v450 = vshll.u32 %v441, %v448
    %v451 = vshrl.u32 %v433, %v449
    %v452 = vor.u32 %v450, %v451
    %v453 = vsub.s32 4294967266, %v448
    %v454 = vadd.s32 %v453, 127
    %v455 = vshll.u32 %v454, 23
    %v456 = vor.u32 4788187, %v455
    %v457 = vand.u32 2147483647, %v456
    %v459 = vcvt.s32.f32 %v452
    %v460 = vmul.f32 %v459, %v457
    %v461 = vxor.u32 %v460, 2147483648
    %v462 = vsel %vm341, %v461, %v460
    %v463 = vsub.s32 4, %v439
    %v464 = vsel %vm341, %v463, %v439
    %v465 = vsel %vm340, %v183, %v462
    %v466 = vsel %vm340, 0, %v464
    %v467 = vmul.f32 %v465, %v465
    %v468 = vmul.f32 %v467, -0.001358992
    %v469 = vadd.f32 %v468, 0.041655596
    %v470 = vmul.f32 %v467, %v469
    %v471 = vadd.f32 %v470, -0.4999988
    %v472 = vmul.f32 %v467, %v471
    %v473 = vadd.f32 1.0, %v472
    %v474 = vmul.f32 %v465, %v465
    %v475 = vmul.f32 %v474, -0.00019511016
    %v476 = vadd.f32 %v475, 0.008332121
    %v477 = vmul.f32 %v474, %v476
    %v478 = vadd.f32 %v477, -0.16666654
    %v479 = vmul.f32 %v474, %v478
    %v480 = vadd.f32 %v479, 1.0
    %v481 = vmul.f32 %v480, %v465
    %vm482 = vweird.f32 %v183
    %v483 = vadd.s32 %v466, 3
    %v484 = vand.u32 %v483, 3
    %vm485 = vcmp.lt.s32.totalorder %v484, 2
    %vm486 = vcmp.eq.s32.totalorder %v484, 0
    %v487 = vxor.u32 %v481, 2147483648
    %v488 = vsel %vm486, %v473, %v487
    %vm489 = vcmp.eq.s32.totalorder %v484, 2
    %v490 = vxor.u32 %v473, 2147483648
    %v491 = vsel %vm489, %v490, %v481
    %v492 = vsel %vm485, %v488, %v491
    %v493 = vsel %vm482, nan, %v492
    %v494 = vld [vmem:[#allocation6] sm:$0xff]
    %v495 = vld [vmem:[#allocation6 + $0x8] sm:$0xff]
    %v496 = vld [vmem:[#allocation6 + $0x10] sm:$0xff]
    %v497 = vld [vmem:[#allocation6 + $0x18] sm:$0xff]
    %498 = vxpose.xlu0.b32.start [1/16] %v338, 128
    %499 = vxpose.xlu0.b32.cont [2/16] %v493, 128
    %500 = vxpose.xlu0.b32.cont [3/16] 0.0, 128
    %501 = vxpose.xlu0.b32.cont [4/16] 0.0, 128
    %502 = vxpose.xlu0.b32.cont [5/16] 0.0, 128
    %503 = vxpose.xlu0.b32.cont [6/16] 0.0, 128
    %504 = vxpose.xlu0.b32.cont [7/16] 0.0, 128
    %505 = vxpose.xlu0.b32.cont [8/16] 0.0, 128
    %506 = vxpose.xlu0.b32.cont [9/16] 0.0, 128
    %507 = vxpose.xlu0.b32.cont [10/16] 0.0, 128
    %508 = vxpose.xlu0.b32.cont [11/16] 0.0, 128
    %509 = vxpose.xlu0.b32.cont [12/16] 0.0, 128
    %510 = vxpose.xlu0.b32.cont [13/16] 0.0, 128
    %511 = vxpose.xlu0.b32.cont [14/16] 0.0, 128
    %512 = vxpose.xlu0.b32.cont [15/16] 0.0, 128
    %513 = vxpose.xlu0.b32.end [16/16] 0.0, 128
    %v514 = vpop.trf.xlu0
    %v515 = vpop.trf.xlu0
    %v516 = vpop.trf.xlu0
    %v517 = vpop.trf.xlu0
    %v518 = vpop.trf.xlu0
    %v519 = vpop.trf.xlu0
    %v520 = vpop.trf.xlu0
    %v521 = vpop.trf.xlu0
    %v522 = vpop.trf.xlu0
    %v523 = vpop.trf.xlu0
    %v524 = vpop.trf.xlu0
    %v525 = vpop.trf.xlu0
    %v526 = vpop.trf.xlu0
    %v527 = vpop.trf.xlu0
    %v528 = vpop.trf.xlu0
    %v529 = vpop.trf.xlu0
    %vm530 = vcmask 130048
    %v532 = vsel %vm530, %v514, 0
    %v535 = vsel %vm530, %v515, 0
    %537 = vmatpush.msra.mxu0 0.0
    %538 = vmatpush.msra.mxu0 0.0
    %539 = vmatpush.msra.mxu0 0.0
    %540 = vmatpush.msra.mxu0 0.0
    %541 = vmatpush.msra.mxu0 0.0
    %542 = vmatpush.msra.mxu0 0.0
    %543 = vmatpush.msra.mxu0 0.0
    %544 = vmatpush.msra.mxu0 0.0
    %545 = vmatpush.msra.mxu0 0.0
    %546 = vmatpush.msra.mxu0 0.0
    %547 = vmatpush.msra.mxu0 0.0
    %548 = vmatpush.msra.mxu0 0.0
    %549 = vmatpush.msra.mxu0 0.0
    %550 = vmatpush.msra.mxu0 0.0
    %551 = vmatpush.msra.mxu0 %v496
    %552 = vmatpush.msra.mxu0 %v494
    %553 = vmatmul.f32.gmra.mxu0 %v532
    %v554 = vpop.f32.mrf.mxu0
    %v555 = vadd.f32 0.0, %v554
    %556 = vmatmul.f32.gmra.mxu0 %v535
    %v557 = vpop.f32.mrf.mxu0
    %v558 = vadd.f32 0.0, %v557
    %559 = vdwg.mxu0
    %560 = vmatpush.msra.mxu0 0.0
    %561 = vmatpush.msra.mxu0 0.0
    %562 = vmatpush.msra.mxu0 0.0
    %563 = vmatpush.msra.mxu0 0.0
    %564 = vmatpush.msra.mxu0 0.0
    %565 = vmatpush.msra.mxu0 0.0
    %566 = vmatpush.msra.mxu0 0.0
    %567 = vmatpush.msra.mxu0 0.0
    %568 = vmatpush.msra.mxu0 0.0
    %569 = vmatpush.msra.mxu0 0.0
    %570 = vmatpush.msra.mxu0 0.0
    %571 = vmatpush.msra.mxu0 0.0
    %572 = vmatpush.msra.mxu0 0.0
    %573 = vmatpush.msra.mxu0 0.0
    %574 = vmatpush.msra.mxu0 %v497
    %575 = vmatpush.msra.mxu0 %v495
    %576 = vmatmul.f32.gmra.mxu0 %v532
    %v577 = vpop.f32.mrf.mxu0
    %v578 = vadd.f32 0.0, %v577
    %579 = vmatmul.f32.gmra.mxu0 %v535
    %v580 = vpop.f32.mrf.mxu0
    %v581 = vadd.f32 0.0, %v580
    %582 = vdwg.mxu0
    %vm583 = vcmp.lt.f32.partialorder %v166, 5.0
    %vm584 = vcmp.lt.f32.partialorder %v167, 5.0
    %v585 = vmul.f32 %v166, 0.62831855
    %v586 = vmul.f32 %v167, 0.62831855
    %v587 = vand.u32 2147483647, %v585
    %vm588 = vcmp.le.f32.partialorder %v587, 0.7853982
    %vm589 = vcmp.lt.s32.totalorder %v585, 0
    %v590 = vand.u32 %v585, 2139095040
    %v591 = vshrl.u32 %v590, 23
    %v592 = vsub.s32 %v591, 127
    %v593 = vand.u32 2147483647, %v585
    %v594 = vand.u32 %v593, 8388607
    %v595 = vor.u32 %v594, 8388608
    %v596 = vsub.s32 0, %v595
    %v597 = vadd.s32 %v592, 1
    %vm598 = vcmp.gt.s32.totalorder %v597, 0
    %v599 = vsel %vm598, %v597, 0
    %v600 = vshrl.u32 %v599, 5
    %v601 = vand.u32 %v599, 31
    %v602 = vsub.s32 32, %v601
    %v603 = vshrl.u32 683565275, %v602
    %v604 = vshll.u32 683565275, %v601
    %v605 = vshrl.u32 2475754826, %v602
    %v606 = vor.u32 %v604, %v605
    %v607 = vshll.u32 2475754826, %v601
    %v608 = vshrl.u32 2131351028, %v602
    %v609 = vor.u32 %v607, %v608
    %v610 = vshll.u32 2131351028, %v601
    %v611 = vshrl.u32 2102212464, %v602
    %v612 = vor.u32 %v610, %v611
    %v613 = vshll.u32 2102212464, %v601
    %v614 = vshrl.u32 920167782, %v602
    %v615 = vor.u32 %v613, %v614
    %v616 = vshll.u32 920167782, %v601
    %v617 = vshrl.u32 1326507024, %v602
    %v618 = vor.u32 %v616, %v617
    %vm619 = vcmp.lt.s32.totalorder %v600, 1
    %vm620 = vcmp.lt.s32.totalorder %v600, 2
    %vm621 = vcmp.lt.s32.totalorder %v600, 3
    %vm622 = vcmp.lt.s32.totalorder %v600, 4
    %v623 = vsel %vm619, %v603, %v606
    %v624 = vsel %vm622, %v612, 2102212464
    %v625 = vsel %vm621, %v609, %v624
    %v626 = vsel %vm620, %v623, %v625
    %v627 = vsel %vm619, %v606, %v609
    %v628 = vsel %vm622, %v615, 920167782
    %v629 = vsel %vm621, %v612, %v628
    %v630 = vsel %vm620, %v627, %v629
    %v631 = vsel %vm619, %v609, %v612
    %v632 = vsel %vm622, %v618, 1326507024
    %v633 = vsel %vm621, %v615, %v632
    %v634 = vsel %vm620, %v631, %v633
    %v635 = vshll.u32 %v595, 8
    %v636 = vand.u32 %v635, 65535
    %v637 = vshrl.u32 %v635, 16
    %v638 = vand.u32 %v634, 65535
    %v639 = vshrl.u32 %v634, 16
    %v640 = vmul.u32 %v636, %v638
    %v641 = vmul.u32 %v636, %v639
    %v642 = vmul.u32 %v637, %v638
    %v643 = vmul.u32 %v637, %v639
    %v644 = vshll.u32 %v641, 16
    %v645 = vshrl.u32 %v641, 16
    %v646 = vshll.u32 %v642, 16
    %v647 = vshrl.u32 %v642, 16
    %vm648 = vc.u32 %v640, %v644
    %v649 = vsel %vm648, 1, 0
    %v650 = vadd.s32 %v640, %v644
    %v651 = vadd.s32 %v643, %v649
    %vm652 = vc.u32 %v650, %v646
    %v653 = vsel %vm652, 1, 0
    %v654 = vadd.s32 %v650, %v646
    %v655 = vadd.s32 %v651, %v653
    %v656 = vadd.s32 %v655, %v645
    %v657 = vadd.s32 %v656, %v647
    %v658 = vand.u32 %v635, 65535
    %v659 = vshrl.u32 %v635, 16
    %v660 = vand.u32 %v630, 65535
    %v661 = vshrl.u32 %v630, 16
    %v662 = vmul.u32 %v658, %v660
    %v663 = vmul.u32 %v658, %v661
    %v664 = vmul.u32 %v659, %v660
    %v665 = vmul.u32 %v659, %v661
    %v666 = vshll.u32 %v663, 16
    %v667 = vshrl.u32 %v663, 16
    %v668 = vshll.u32 %v664, 16
    %v669 = vshrl.u32 %v664, 16
    %vm670 = vc.u32 %v662, %v666
    %v671 = vsel %vm670, 1, 0
    %v672 = vadd.s32 %v662, %v666
    %v673 = vadd.s32 %v665, %v671
    %vm674 = vc.u32 %v672, %v668
    %v675 = vsel %vm674, 1, 0
    %v676 = vadd.s32 %v672, %v668
    %v677 = vadd.s32 %v673, %v675
    %v678 = vadd.s32 %v677, %v667
    %v679 = vadd.s32 %v678, %v669
    %v680 = vmul.u32 %v635, %v626
    %v681 = vadd.s32 %v657, %v676
    %vm682 = vc.u32 %v657, %v676
    %v683 = vadd.s32 %v679, 1
    %v684 = vsel %vm682, %v683, %v679
    %v685 = vadd.s32 %v680, %v684
    %v686 = vadd.s32 %v685, 536870912
    %v687 = vshrl.u32 %v686, 30
    %v688 = vshll.u32 %v687, 30
    %v689 = vsub.s32 %v685, %v688
    %vm690 = vcmp.lt.s32.totalorder %v689, 0
    %v691 = vsub.s32 0, %v689
    %v692 = vsel %vm690, %v691, %v689
    %v693 = vclz %v692
    %v694 = vsub.s32 %v693, 2
    %vm695 = vcmp.gt.s32.totalorder 0, %v694
    %v696 = vsel %vm695, 0, %v694
    %v697 = vsub.s32 32, %v696
    %v698 = vshll.u32 %v689, %v696
    %v699 = vshrl.u32 %v681, %v697
    %v700 = vor.u32 %v698, %v699
    %v701 = vsub.s32 4294967266, %v696
    %v702 = vadd.s32 %v701, 127
    %v703 = vshll.u32 %v702, 23
    %v704 = vor.u32 4788187, %v703
    %v705 = vand.u32 2147483647, %v704
    %v707 = vcvt.s32.f32 %v700
    %v708 = vmul.f32 %v707, %v705
    %v709 = vxor.u32 %v708, 2147483648
    %v710 = vsel %vm589, %v709, %v708
    %v711 = vsub.s32 4, %v687
    %v712 = vsel %vm589, %v711, %v687
    %v713 = vsel %vm588, %v585, %v710
    %v714 = vsel %vm588, 0, %v712
    %v715 = vmul.f32 %v713, %v713
    %v716 = vmul.f32 %v715, -0.001358992
    %v717 = vadd.f32 %v716, 0.041655596
    %v718 = vmul.f32 %v715, %v717
    %v719 = vadd.f32 %v718, -0.4999988
    %v720 = vmul.f32 %v715, %v719
    %v721 = vadd.f32 1.0, %v720
    %v722 = vmul.f32 %v713, %v713
    %v723 = vmul.f32 %v722, -0.00019511016
    %v724 = vadd.f32 %v723, 0.008332121
    %v725 = vmul.f32 %v722, %v724
    %v726 = vadd.f32 %v725, -0.16666654
    %v727 = vmul.f32 %v722, %v726
    %v728 = vadd.f32 %v727, 1.0
    %v729 = vmul.f32 %v728, %v713
    %vm730 = vweird.f32 %v585
    %v731 = vand.u32 %v714, 3
    %vm732 = vcmp.lt.s32.totalorder %v731, 2
    %vm733 = vcmp.eq.s32.totalorder %v731, 0
    %v734 = vxor.u32 %v729, 2147483648
    %v735 = vsel %vm733, %v721, %v734
    %vm736 = vcmp.eq.s32.totalorder %v731, 2
    %v737 = vxor.u32 %v721, 2147483648
    %v738 = vsel %vm736, %v737, %v729
    %v739 = vsel %vm732, %v735, %v738
    %v740 = vsel %vm730, nan, %v739
    %v741 = vand.u32 2147483647, %v586
    %vm742 = vcmp.le.f32.partialorder %v741, 0.7853982
    %vm743 = vcmp.lt.s32.totalorder %v586, 0
    %v744 = vand.u32 %v586, 2139095040
    %v745 = vshrl.u32 %v744, 23
    %v746 = vsub.s32 %v745, 127
    %v747 = vand.u32 2147483647, %v586
    %v748 = vand.u32 %v747, 8388607
    %v749 = vor.u32 %v748, 8388608
    %v750 = vsub.s32 0, %v749
    %v751 = vadd.s32 %v746, 1
    %vm752 = vcmp.gt.s32.totalorder %v751, 0
    %v753 = vsel %vm752, %v751, 0
    %v754 = vshrl.u32 %v753, 5
    %v755 = vand.u32 %v753, 31
    %v756 = vsub.s32 32, %v755
    %v757 = vshrl.u32 683565275, %v756
    %v758 = vshll.u32 683565275, %v755
    %v759 = vshrl.u32 2475754826, %v756
    %v760 = vor.u32 %v758, %v759
    %v761 = vshll.u32 2475754826, %v755
    %v762 = vshrl.u32 2131351028, %v756
    %v763 = vor.u32 %v761, %v762
    %v764 = vshll.u32 2131351028, %v755
    %v765 = vshrl.u32 2102212464, %v756
    %v766 = vor.u32 %v764, %v765
    %v767 = vshll.u32 2102212464, %v755
    %v768 = vshrl.u32 920167782, %v756
    %v769 = vor.u32 %v767, %v768
    %v770 = vshll.u32 920167782, %v755
    %v771 = vshrl.u32 1326507024, %v756
    %v772 = vor.u32 %v770, %v771
    %vm773 = vcmp.lt.s32.totalorder %v754, 1
    %vm774 = vcmp.lt.s32.totalorder %v754, 2
    %vm775 = vcmp.lt.s32.totalorder %v754, 3
    %vm776 = vcmp.lt.s32.totalorder %v754, 4
    %v777 = vsel %vm773, %v757, %v760
    %v778 = vsel %vm776, %v766, 2102212464
    %v779 = vsel %vm775, %v763, %v778
    %v780 = vsel %vm774, %v777, %v779
    %v781 = vsel %vm773, %v760, %v763
    %v782 = vsel %vm776, %v769, 920167782
    %v783 = vsel %vm775, %v766, %v782
    %v784 = vsel %vm774, %v781, %v783
    %v785 = vsel %vm773, %v763, %v766
    %v786 = vsel %vm776, %v772, 1326507024
    %v787 = vsel %vm775, %v769, %v786
    %v788 = vsel %vm774, %v785, %v787
    %v789 = vshll.u32 %v749, 8
    %v790 = vand.u32 %v789, 65535
    %v791 = vshrl.u32 %v789, 16
    %v792 = vand.u32 %v788, 65535
    %v793 = vshrl.u32 %v788, 16
    %v794 = vmul.u32 %v790, %v792
    %v795 = vmul.u32 %v790, %v793
    %v796 = vmul.u32 %v791, %v792
    %v797 = vmul.u32 %v791, %v793
    %v798 = vshll.u32 %v795, 16
    %v799 = vshrl.u32 %v795, 16
    %v800 = vshll.u32 %v796, 16
    %v801 = vshrl.u32 %v796, 16
    %vm802 = vc.u32 %v794, %v798
    %v803 = vsel %vm802, 1, 0
    %v804 = vadd.s32 %v794, %v798
    %v805 = vadd.s32 %v797, %v803
    %vm806 = vc.u32 %v804, %v800
    %v807 = vsel %vm806, 1, 0
    %v808 = vadd.s32 %v804, %v800
    %v809 = vadd.s32 %v805, %v807
    %v810 = vadd.s32 %v809, %v799
    %v811 = vadd.s32 %v810, %v801
    %v812 = vand.u32 %v789, 65535
    %v813 = vshrl.u32 %v789, 16
    %v814 = vand.u32 %v784, 65535
    %v815 = vshrl.u32 %v784, 16
    %v816 = vmul.u32 %v812, %v814
    %v817 = vmul.u32 %v812, %v815
    %v818 = vmul.u32 %v813, %v814
    %v819 = vmul.u32 %v813, %v815
    %v820 = vshll.u32 %v817, 16
    %v821 = vshrl.u32 %v817, 16
    %v822 = vshll.u32 %v818, 16
    %v823 = vshrl.u32 %v818, 16
    %vm824 = vc.u32 %v816, %v820
    %v825 = vsel %vm824, 1, 0
    %v826 = vadd.s32 %v816, %v820
    %v827 = vadd.s32 %v819, %v825
    %vm828 = vc.u32 %v826, %v822
    %v829 = vsel %vm828, 1, 0
    %v830 = vadd.s32 %v826, %v822
    %v831 = vadd.s32 %v827, %v829
    %v832 = vadd.s32 %v831, %v821
    %v833 = vadd.s32 %v832, %v823
    %v834 = vmul.u32 %v789, %v780
    %v835 = vadd.s32 %v811, %v830
    %vm836 = vc.u32 %v811, %v830
    %v837 = vadd.s32 %v833, 1
    %v838 = vsel %vm836, %v837, %v833
    %v839 = vadd.s32 %v834, %v838
    %v840 = vadd.s32 %v839, 536870912
    %v841 = vshrl.u32 %v840, 30
    %v842 = vshll.u32 %v841, 30
    %v843 = vsub.s32 %v839, %v842
    %vm844 = vcmp.lt.s32.totalorder %v843, 0
    %v845 = vsub.s32 0, %v843
    %v846 = vsel %vm844, %v845, %v843
    %v847 = vclz %v846
    %v848 = vsub.s32 %v847, 2
    %vm849 = vcmp.gt.s32.totalorder 0, %v848
    %v850 = vsel %vm849, 0, %v848
    %v851 = vsub.s32 32, %v850
    %v852 = vshll.u32 %v843, %v850
    %v853 = vshrl.u32 %v835, %v851
    %v854 = vor.u32 %v852, %v853
    %v855 = vsub.s32 4294967266, %v850
    %v856 = vadd.s32 %v855, 127
    %v857 = vshll.u32 %v856, 23
    %v858 = vor.u32 4788187, %v857
    %v859 = vand.u32 2147483647, %v858
    %v861 = vcvt.s32.f32 %v854
    %v862 = vmul.f32 %v861, %v859
    %v863 = vxor.u32 %v862, 2147483648
    %v864 = vsel %vm743, %v863, %v862
    %v865 = vsub.s32 4, %v841
    %v866 = vsel %vm743, %v865, %v841
    %v867 = vsel %vm742, %v586, %v864
    %v868 = vsel %vm742, 0, %v866
    %v869 = vmul.f32 %v867, %v867
    %v870 = vmul.f32 %v869, -0.001358992
    %v871 = vadd.f32 %v870, 0.041655596
    %v872 = vmul.f32 %v869, %v871
    %v873 = vadd.f32 %v872, -0.4999988
    %v874 = vmul.f32 %v869, %v873
    %v875 = vadd.f32 1.0, %v874
    %v876 = vmul.f32 %v867, %v867
    %v877 = vmul.f32 %v876, -0.00019511016
    %v878 = vadd.f32 %v877, 0.008332121
    %v879 = vmul.f32 %v876, %v878
    %v880 = vadd.f32 %v879, -0.16666654
    %v881 = vmul.f32 %v876, %v880
    %v882 = vadd.f32 %v881, 1.0
    %v883 = vmul.f32 %v882, %v867
    %vm884 = vweird.f32 %v586
    %v885 = vand.u32 %v868, 3
    %vm886 = vcmp.lt.s32.totalorder %v885, 2
    %vm887 = vcmp.eq.s32.totalorder %v885, 0
    %v888 = vxor.u32 %v883, 2147483648
    %v889 = vsel %vm887, %v875, %v888
    %vm890 = vcmp.eq.s32.totalorder %v885, 2
    %v891 = vxor.u32 %v875, 2147483648
    %v892 = vsel %vm890, %v891, %v883
    %v893 = vsel %vm886, %v889, %v892
    %v894 = vsel %vm884, nan, %v893
    %v895 = vadd.f32 %v740, 1.0
    %v896 = vadd.f32 %v894, 1.0
    %v897 = vmul.f32 %v895, 0.5
    %v898 = vmul.f32 %v896, 0.5
    %v899 = vsel %vm583, %v897, 0.0
    %v900 = vsel %vm584, %v898, 0.0
    %902 = vset.pattern.permute.xlu0 0
    %903 = vperm.xlu0 %902, %v168
    %v904 = vpop.permute.xlu0 %903
    %907 = vset.pattern.permute.xlu0 0
    %908 = vperm.xlu0 %907, %v169
    %v909 = vpop.permute.xlu0 %908
    %v911 = vmul.f32 %v555, %v904
    %v912 = vmul.f32 %v578, %v904
    %v913 = vmul.f32 %v558, %v909
    %v914 = vmul.f32 %v581, %v909
    %v915 = vld [vmem:[%s8] sm:$0x3]
    %v917 = vperm.slane %v915, 0
    %v918 = vperm.slane %v915, 1
    %v921 = vadd.f32 %v911, %v917
    %v922 = vadd.f32 %v912, %v918
    %v923 = vadd.f32 %v913, %v917
    %v924 = vadd.f32 %v914, %v918
    %926 = vset.pattern.permute.xlu0 0
    %927 = vperm.xlu0 %926, %v899
    %v928 = vpop.permute.xlu0 %927
    %931 = vset.pattern.permute.xlu0 0
    %932 = vperm.xlu0 %931, %v900
    %v933 = vpop.permute.xlu0 %932
    %v935 = vmul.f32 %v921, %v928
    %v936 = vmul.f32 %v922, %v928
    %v937 = vmul.f32 %v923, %v933
    %v938 = vmul.f32 %v924, %v933
    %v939 = vlaneseq
    %v940 = vand.u32 %v939, 127
    %v941 = vld [vmem:[%s128] sm:$0xff]
    %v942 = vld [vmem:[%s128 + $0x8] sm:$0xff]
    %943 = vset.pattern.permute.xlu0 0
    %944 = vperm.xlu0 %943, %v941
    %v945 = vpop.permute.xlu0 %944
    %946 = vset.pattern.permute.xlu0 0
    %947 = vperm.xlu0 %946, %v942
    %v948 = vpop.permute.xlu0 %947
    %vm949 = vcmp.eq.s32.totalorder %v945, %v940
    %vm950 = vcmp.eq.s32.totalorder %v948, %v940
    %v951 = vsel %vm949, 1, 0
    %v952 = vsel %vm950, 1, 0
    %v953 = vcvt.s32.f32 %v951
    %v954 = vcvt.s32.f32 %v952
    %v955 = vpack.c.bf16 %v954, %v953
    %v956 = vld [vmem:[%s134] sm:$0x1]
    %v957 = vperm.slane %v956, 0
    %vm958 = vcmp.eq.s32.totalorder %v171, %v957
    %v959 = vsel %vm958, 1, 0
    %v960 = vcvt.s32.f32 %v959
    %v961 = vpack.c.bf16 %v960, %v960
    %v962 = vld [vmem:[#allocation3] sm:$0xff]
    %v963 = vld [vmem:[#allocation3 + $0x8] sm:$0xff]
    %v964 = vld [vmem:[#allocation3 + $0x10] sm:$0xf]
    %v968 = vunpack.c.l.b16 %v962
    %v969 = vunpack.c.h.b16 %v962
    %v970 = vunpack.c.l.b16 %v963
    %v971 = vunpack.c.h.b16 %v963
    %v972 = vunpack.c.l.b16 %v964
    %v973 = vpack.c.b16 %v968, %v968
    %v974 = vpack.c.b16 %v969, %v969
    %v975 = vpack.c.b16 %v970, %v970
    %v976 = vpack.c.b16 %v971, %v971
    %v977 = vpack.c.b16 %v972, %v972
    %vm978 = vcmask 64512
    %v980 = vsel %vm978, %v955, 0
    %vm982 = vcmask 1043456
    %v984 = vsel %vm982, %v973, 0
    %v987 = vsel %vm982, %v974, 0
    %v990 = vsel %vm982, %v975, 0
    %v993 = vsel %vm982, %v976, 0
    %v996 = vsel %vm982, %v977, 0
    %998 = vmatpush.bf16.msra.mxu0 0
    %999 = vmatpush.bf16.msra.mxu0 0
    %1000 = vmatpush.bf16.msra.mxu0 0
    %1001 = vmatpush.bf16.msra.mxu0 0
    %1002 = vmatpush.bf16.msra.mxu0 0
    %1003 = vmatpush.bf16.msra.mxu0 0
    %1004 = vmatpush.bf16.msra.mxu0 0
    %1005 = vmatpush.bf16.msra.mxu0 %v984
    %1006 = vmatmul.bf16.gmra.mxu0 %v980
    %v1007 = vpop.f32.mrf.mxu0
    %v1008 = vadd.f32 0.0, %v1007
    %v1009 = vpop.f32.mrf.mxu0
    %v1010 = vadd.f32 0.0, %v1009
    %1011 = vdwg.mxu0
    %1012 = vmatpush.bf16.msra.mxu0 0
    %1013 = vmatpush.bf16.msra.mxu0 0
    %1014 = vmatpush.bf16.msra.mxu0 0
    %1015 = vmatpush.bf16.msra.mxu0 0
    %1016 = vmatpush.bf16.msra.mxu0 0
    %1017 = vmatpush.bf16.msra.mxu0 0
    %1018 = vmatpush.bf16.msra.mxu0 0
    %1019 = vmatpush.bf16.msra.mxu0 %v987
    %1020 = vmatmul.bf16.gmra.mxu0 %v980
    %v1021 = vpop.f32.mrf.mxu0
    %v1022 = vadd.f32 0.0, %v1021
    %v1023 = vpop.f32.mrf.mxu0
    %v1024 = vadd.f32 0.0, %v1023
    %1025 = vdwg.mxu0
    %1026 = vmatpush.bf16.msra.mxu0 0
    %1027 = vmatpush.bf16.msra.mxu0 0
    %1028 = vmatpush.bf16.msra.mxu0 0
    %1029 = vmatpush.bf16.msra.mxu0 0
    %1030 = vmatpush.bf16.msra.mxu0 0
    %1031 = vmatpush.bf16.msra.mxu0 0
    %1032 = vmatpush.bf16.msra.mxu0 0
    %1033 = vmatpush.bf16.msra.mxu0 %v990
    %1034 = vmatmul.bf16.gmra.mxu0 %v980
    %v1035 = vpop.f32.mrf.mxu0
    %v1036 = vadd.f32 0.0, %v1035
    %v1037 = vpop.f32.mrf.mxu0
    %v1038 = vadd.f32 0.0, %v1037
    %1039 = vdwg.mxu0
    %1040 = vmatpush.bf16.msra.mxu0 0
    %1041 = vmatpush.bf16.msra.mxu0 0
    %1042 = vmatpush.bf16.msra.mxu0 0
    %1043 = vmatpush.bf16.msra.mxu0 0
    %1044 = vmatpush.bf16.msra.mxu0 0
    %1045 = vmatpush.bf16.msra.mxu0 0
    %1046 = vmatpush.bf16.msra.mxu0 0
    %1047 = vmatpush.bf16.msra.mxu0 %v993
    %1048 = vmatmul.bf16.gmra.mxu0 %v980
    %v1049 = vpop.f32.mrf.mxu0
    %v1050 = vadd.f32 0.0, %v1049
    %v1051 = vpop.f32.mrf.mxu0
    %v1052 = vadd.f32 0.0, %v1051
    %1053 = vdwg.mxu0
    %1054 = vmatpush.bf16.msra.mxu0 0
    %1055 = vmatpush.bf16.msra.mxu0 0
    %1056 = vmatpush.bf16.msra.mxu0 0
    %1057 = vmatpush.bf16.msra.mxu0 0
    %1058 = vmatpush.bf16.msra.mxu0 0
    %1059 = vmatpush.bf16.msra.mxu0 0
    %1060 = vmatpush.bf16.msra.mxu0 0
    %1061 = vmatpush.bf16.msra.mxu0 %v996
    %1062 = vmatmul.bf16.gmra.mxu0 %v980
    %v1063 = vpop.f32.mrf.mxu0
    %v1064 = vadd.f32 0.0, %v1063
    %v1065 = vpop.f32.mrf.mxu0
    %v1066 = vadd.f32 0.0, %v1065
    %1067 = vdwg.mxu0
    %v1068 = vmul.f32 %v935, %v1008
    %v1069 = vmul.f32 %v936, %v1022
    %v1070 = vmul.f32 %v937, %v1010
    %v1071 = vmul.f32 %v938, %v1024
    %v1072 = vld [vmem:[%s141] sm:$0xff]
    %v1073 = vld [vmem:[%s141 + $0x8] sm:$0xff]
    %v1074 = vmul.f32 %v1072, %v904
    %v1075 = vmul.f32 %v1073, %v909
    %v1076 = vmul.f32 %v1036, %v1068
    %v1077 = vmul.f32 %v1038, %v1070
    %1079 = vset.pattern.permute.xlu0 0
    %1080 = vperm.xlu0 %1079, %v1074
    %v1081 = vpop.permute.xlu0 %1080
    %1084 = vset.pattern.permute.xlu0 0
    %1085 = vperm.xlu0 %1084, %v1075
    %v1086 = vpop.permute.xlu0 %1085
    %v1088 = vmul.f32 %v1069, %v1081
    %v1089 = vmul.f32 %v1071, %v1086
    %v1090 = vadd.f32 %v1076, %v1088
    %v1091 = vadd.f32 %v1077, %v1089
    %v1092 = vmul.f32 %v1050, %v1068
    %v1093 = vmul.f32 %v1052, %v1070
    %1094 = vset.pattern.permute.xlu0 1
    %1095 = vperm.xlu0 %1094, %v1074
    %v1096 = vpop.permute.xlu0 %1095
    %1098 = vset.pattern.permute.xlu0 1
    %1099 = vperm.xlu0 %1098, %v1075
    %v1100 = vpop.permute.xlu0 %1099
    %v1102 = vmul.f32 %v1069, %v1096
    %v1103 = vmul.f32 %v1071, %v1100
    %v1104 = vadd.f32 %v1092, %v1102
    %v1105 = vadd.f32 %v1093, %v1103
    %v1106 = vmul.f32 %v1064, %v1068
    %v1107 = vmul.f32 %v1066, %v1070
    %1108 = vset.pattern.permute.xlu0 2
    %1109 = vperm.xlu0 %1108, %v1074
    %v1110 = vpop.permute.xlu0 %1109
    %1112 = vset.pattern.permute.xlu0 2
    %1113 = vperm.xlu0 %1112, %v1075
    %v1114 = vpop.permute.xlu0 %1113
    %v1116 = vmul.f32 %v1069, %v1110
    %v1117 = vmul.f32 %v1071, %v1114
    %v1118 = vadd.f32 %v1106, %v1116
    %v1119 = vadd.f32 %v1107, %v1117
    %v1120 = vpack.c.bf16 %v1071, %v1069
    %v1121 = vpack.c.bf16 %v1091, %v1090
    %v1122 = vpack.c.bf16 %v1105, %v1104
    %v1123 = vpack.c.bf16 %v1119, %v1118
    %v1124 = vld [vmem:[#allocation2] sm:$0xff]
    %v1125 = vld [vmem:[#allocation2 + $0x8] sm:$0xff]
    %v1126 = vld [vmem:[#allocation2 + $0x10] sm:$0xff]
    %v1127 = vld [vmem:[#allocation2 + $0x18] sm:$0xff]
    %v1129 = vsel %vm530, %v961, 0
    %1131 = vmatpush.bf16.msra.mxu0 0
    %1132 = vmatpush.bf16.msra.mxu0 0
    %1133 = vmatpush.bf16.msra.mxu0 0
    %1134 = vmatpush.bf16.msra.mxu0 0
    %1135 = vmatpush.bf16.msra.mxu0 0
    %1136 = vmatpush.bf16.msra.mxu0 0
    %1137 = vmatpush.bf16.msra.mxu0 0
    %1138 = vmatpush.bf16.msra.mxu0 %v1120
    %1139 = vmatmul.bf16.gmra.mxu0 %v1129
    %v1140 = vpop.f32.mrf.mxu0
    %v1141 = vadd.f32 0.0, %v1140
    %v1142 = vpop.f32.mrf.mxu0
    %1143 = vdwg.mxu0
    %1144 = vmatpush.bf16.msra.mxu0 0
    %1145 = vmatpush.bf16.msra.mxu0 0
    %1146 = vmatpush.bf16.msra.mxu0 0
    %1147 = vmatpush.bf16.msra.mxu0 0
    %1148 = vmatpush.bf16.msra.mxu0 0
    %1149 = vmatpush.bf16.msra.mxu0 0
    %1150 = vmatpush.bf16.msra.mxu0 0
    %1151 = vmatpush.bf16.msra.mxu0 %v1121
    %1152 = vmatmul.bf16.gmra.mxu0 %v1129
    %v1153 = vpop.f32.mrf.mxu0
    %v1154 = vadd.f32 0.0, %v1153
    %v1155 = vpop.f32.mrf.mxu0
    %1156 = vdwg.mxu0
    %1157 = vmatpush.bf16.msra.mxu0 0
    %1158 = vmatpush.bf16.msra.mxu0 0
    %1159 = vmatpush.bf16.msra.mxu0 0
    %1160 = vmatpush.bf16.msra.mxu0 0
    %1161 = vmatpush.bf16.msra.mxu0 0
    %1162 = vmatpush.bf16.msra.mxu0 0
    %1163 = vmatpush.bf16.msra.mxu0 0
    %1164 = vmatpush.bf16.msra.mxu0 %v1122
    %1165 = vmatmul.bf16.gmra.mxu0 %v1129
    %v1166 = vpop.f32.mrf.mxu0
    %v1167 = vadd.f32 0.0, %v1166
    %v1168 = vpop.f32.mrf.mxu0
    %1169 = vdwg.mxu0
    %1170 = vmatpush.bf16.msra.mxu0 0
    %1171 = vmatpush.bf16.msra.mxu0 0
    %1172 = vmatpush.bf16.msra.mxu0 0
    %1173 = vmatpush.bf16.msra.mxu0 0
    %1174 = vmatpush.bf16.msra.mxu0 0
    %1175 = vmatpush.bf16.msra.mxu0 0
    %1176 = vmatpush.bf16.msra.mxu0 0
    %1177 = vmatpush.bf16.msra.mxu0 %v1123
    %1178 = vmatmul.bf16.gmra.mxu0 %v1129
    %v1179 = vpop.f32.mrf.mxu0
    %v1180 = vadd.f32 0.0, %v1179
    %v1181 = vpop.f32.mrf.mxu0
    %1182 = vdwg.mxu0
    %v1183 = vadd.f32 %v1124, %v1141
    %v1184 = vadd.f32 %v1125, %v1154
    %v1185 = vadd.f32 %v1126, %v1167
    %v1186 = vadd.f32 %v1127, %v1180
    %1187 = vst [vmem:[#allocation2] sm:$0xff] %v1183
    %1188 = vst [vmem:[#allocation2 + $0x8] sm:$0xff] %v1184
    %1189 = vst [vmem:[#allocation2 + $0x10] sm:$0xff] %v1185
    %1190 = vst [vmem:[#allocation2 + $0x18] sm:$0xff] %v1186
    %p1191 = scmp.eq.s32.totalorder 0, 0
    %p1192 = pnand %p158, %p1191
    %p1193 = pneg %p1192
    // Predicated region
    $region50: #{tpu_custom_call.1} parent=1 // pred_check
      _
    $region51: #{tpu_custom_call.1} parent=1 // pred_check_branch
      %1195 = sbr.rel (%p1192) target = $region53
    $region52: #{tpu_custom_call.1} parent=1 // pred_region
      %v1196 = vld [vmem:[%s0] sm:$0xff]
      %v1197 = vld [vmem:[%s0 + $0x8] sm:$0xff]
      %v1198 = vld [vmem:[%s0 + $0x10] sm:$0xff]
      %v1199 = vld [vmem:[%s0 + $0x18] sm:$0xff]
      %v1200 = vld [vmem:[#allocation2] sm:$0xff]
      %v1201 = vld [vmem:[#allocation2 + $0x8] sm:$0xff]
      %v1202 = vld [vmem:[#allocation2 + $0x10] sm:$0xff]
      %v1203 = vld [vmem:[#allocation2 + $0x18] sm:$0xff]
      %v1204 = vadd.f32 %v1196, %v1200
      %v1205 = vadd.f32 %v1197, %v1201
      %v1206 = vadd.f32 %v1198, %v1202
      %v1207 = vadd.f32 %v1199, %v1203
      %1208 = vst [vmem:[#allocation8] sm:$0xff] %v1204
      %1209 = vst [vmem:[#allocation8 + $0x8] sm:$0xff] %v1205
      %1210 = vst [vmem:[#allocation8 + $0x10] sm:$0xff] %v1206
      %1211 = vst [vmem:[#allocation8 + $0x18] sm:$0xff] %v1207
    $region53: #{tpu_custom_call.1} parent=1 // pred_fallthru
      _
    %p1212 = scmp.gt.s32.totalorder 0, 0
    %p1213 = pnand %p158, %p1212
    %p1214 = pneg %p1213
    // Predicated region
    $region54: #{tpu_custom_call.1} parent=1 // pred_check
      _
    $region55: #{tpu_custom_call.1} parent=1 // pred_check_branch
      %1216 = sbr.rel (%p1213) target = $region57
    $region56: #{tpu_custom_call.1} parent=1 // pred_region
      %v1217 = vld [vmem:[#allocation2] sm:$0xff]
      %v1218 = vld [vmem:[#allocation2 + $0x8] sm:$0xff]
      %v1219 = vld [vmem:[#allocation2 + $0x10] sm:$0xff]
      %v1220 = vld [vmem:[#allocation2 + $0x18] sm:$0xff]
      %1221 = vst [vmem:[#allocation8] sm:$0xff] %v1217
      %1222 = vst [vmem:[#allocation8 + $0x8] sm:$0xff] %v1218
      %1223 = vst [vmem:[#allocation8 + $0x10] sm:$0xff] %v1219
      %1224 = vst [vmem:[#allocation8 + $0x18] sm:$0xff] %v1220
    $region57: #{tpu_custom_call.1} parent=1 // pred_fallthru
      _
    // Predicated region
    $region58: #{tpu_custom_call.1} parent=1 // pred_check
      _
    $region59: #{tpu_custom_call.1} parent=1 // pred_check_branch
      %1226 = sbr.rel (0) target = $region61
    $region60: #{tpu_custom_call.1} parent=1 // pred_region
      %1228 = vsyncadd [#allocation5], 0
      %s1230 = sshll.u32 [#allocation8], 4
      %s1231 = int_to_ptr.vmem [resolvable:$true] %s1230
      %s1232 = sshll.u32 %s9, 4
      %s1233 = int_to_ptr.hbm [resolvable:$true] %s1232
      %1235 = dma.vmem_to_hbm [thread:$0]  %s1231, 512, %s1233, [#allocation5]
    $region61: #{tpu_custom_call.1} parent=1 // pred_fallthru
      _
    // Predicated region
    $region62: #{tpu_custom_call.1} parent=1 // pred_check
      _
    $region63: #{tpu_custom_call.1} parent=1 // pred_check_branch
      %1237 = sbr.rel (0) target = $region65
    $region64: #{tpu_custom_call.1} parent=1 // pred_region
      %1239 = dma.done [#allocation5], 512
    $region65: #{tpu_custom_call.1} parent=1 // pred_fallthru
      _
    %1240 = vsyncpa [#allocation4], 1
    %1241 = vsyncpa [#allocation7], 1
    %1242 = vsyncpa [#allocation5], 1

</llo_original>
